<compile_context>
chip_gen: v7x
topology: tpu7x:2x2x1
jax: 0.10.0
libtpu: 0.0.40
codegen_flags: <defaults>
</compile_context>

<pallas_src>
import math

import numpy as np
import jax
import jax.numpy as jnp
from jax.experimental import pallas as pl

# ---------------- model hyperparameters (small, synthetic) ----------------
D_MODEL = 32
NHEAD = 4
D_FF = 64
SEQ = 8
BATCH = 2
LN_EPS = 1e-5

D_HEAD = D_MODEL // NHEAD
N_TOKENS = SEQ * BATCH           # 16 tokens, (seq, batch) row order

# ---------------- packed parameter slab layouts ----------------------------
# wslab: bf16 (64, 256)
#   rows  0:32, cols   0:192 -> [Wq*scale | Wk | Wv_h @ Wo_h for h=0..3]
#   rows 32:64, cols   0:64  -> W1 (d_model -> d_ff)
#   rows  0:64, cols 192:224 -> W2 (d_ff -> d_model)
QKV_COLS = 2 * D_MODEL + NHEAD * D_MODEL   # 192
WSLAB_ROWS = max(2 * D_MODEL, D_FF)        # 64
WSLAB_COLS = 256
W1_ROW = D_MODEL                           # 32
W2_COL = QKV_COLS                          # 192
# pslab: f32 (24, 256)
#   rows 0:16, cols 0:16  -> additive cross-batch block mask (0 / -1e30)
#   row  16,   cols 0:192 -> fused bias [bq*scale | bk | bv_h@Wo_h (+bo in h=0)]
#   row  17,   cols 0:64  -> b1 ; cols 64:96 -> b2
#   row  18,   cols 0:128 -> [ln1_g | ln1_b | ln2_g | ln2_b]
ROW_BIAS = N_TOKENS                        # 16
ROW_VEC = N_TOKENS + 1                     # 17
ROW_LN = N_TOKENS + 2                      # 18
PSLAB_ROWS = ((N_TOKENS + 3 + 7) // 8) * 8  # 24
PSLAB_COLS = 256


def _encoder_layer_kernel(x_ref, w_ref, p_ref, o_ref):
    # x_ref: (N, D) f32 tokens in (seq, batch) row order
    # w_ref: (64, 256) bf16 packed weight slab
    # p_ref: (24, 256) f32 packed bias / LayerNorm / mask slab
    x = x_ref[...].astype(jnp.float32)                     # (N, D)
    xb = x.astype(jnp.bfloat16)
    n, d = x.shape

    # ---- single fused [Q*scale | K | V@Wo] projection: (N,32) @ (32,256) ----
    # (cols 192:224 of the result are x @ W2-top junk from the slab packing and
    #  are never read; the matching bias columns are zero.)
    qkv = jnp.dot(xb, w_ref[0:D_MODEL, :], preferred_element_type=jnp.float32)
    qkv = qkv + p_ref[ROW_BIAS:ROW_BIAS + 1, :]            # (1, 256) f32 fused bias

    # Trace-time-constant additive block mask (batch id of row i is i % BATCH);
    # keeps attention strictly within each batch element.
    mask_bias = p_ref[0:N_TOKENS, 0:N_TOKENS]              # (N, N)

    # ---- per-head attention; Wo already folded into V', so each head directly
    #      accumulates its (N, D) contribution (no concatenate, no Wo matmul) ----
    attn = jnp.zeros((n, d), jnp.float32)
    for h in range(NHEAD):
        qh = qkv[:, h * D_HEAD:(h + 1) * D_HEAD]                           # (N, 8), pre-scaled
        kh = qkv[:, D_MODEL + h * D_HEAD: D_MODEL + (h + 1) * D_HEAD]      # (N, 8)
        vh = qkv[:, 2 * D_MODEL + h * D_MODEL:
                 2 * D_MODEL + (h + 1) * D_MODEL]                          # (N, 32) = V @ Wo_h (+bias)

        # contract last axis of both operands (trans_b form): no XLU transpose
        s = jax.lax.dot_general(qh, kh, (((1,), (1,)), ((), ())),
                                preferred_element_type=jnp.float32) + mask_bias
        m = jnp.max(s, axis=-1, keepdims=True)
        pexp = jnp.exp(s - m)
        denom = jnp.sum(pexp, axis=-1, keepdims=True)
        pv = jnp.dot(pexp, vh, preferred_element_type=jnp.float32)         # (N, 32)
        # deferred softmax normalization; exact reciprocal (EUP, ~free at N=16)
        attn = attn + pv * pl.reciprocal(denom)

    # ---- residual + LayerNorm 1 (post-norm, biased variance) ----
    h1 = x + attn
    mu = jnp.mean(h1, axis=-1, keepdims=True)
    var = jnp.mean((h1 - mu) ** 2, axis=-1, keepdims=True)
    g1 = p_ref[ROW_LN:ROW_LN + 1, 0:D_MODEL]
    be1 = p_ref[ROW_LN:ROW_LN + 1, D_MODEL:2 * D_MODEL]
    h1 = (h1 - mu) * jax.lax.rsqrt(var + LN_EPS) * g1 + be1

    # ---- feed-forward: Linear -> ReLU -> Linear (bf16 weights, f32 accumulate) ----
    w1 = w_ref[W1_ROW:W1_ROW + D_MODEL, 0:D_FF]            # (32, 64) bf16
    w2 = w_ref[0:D_FF, W2_COL:W2_COL + D_MODEL]            # (64, 32) bf16
    b1 = p_ref[ROW_VEC:ROW_VEC + 1, 0:D_FF]
    b2 = p_ref[ROW_VEC:ROW_VEC + 1, D_FF:D_FF + D_MODEL]
    f = jnp.dot(h1.astype(jnp.bfloat16), w1, preferred_element_type=jnp.float32) + b1
    f = jnp.maximum(f, 0.0)
    f = jnp.dot(f.astype(jnp.bfloat16), w2, preferred_element_type=jnp.float32) + b2

    # ---- residual + LayerNorm 2 ----
    y = h1 + f
    mu2 = jnp.mean(y, axis=-1, keepdims=True)
    var2 = jnp.mean((y - mu2) ** 2, axis=-1, keepdims=True)
    g2 = p_ref[ROW_LN:ROW_LN + 1, 2 * D_MODEL:3 * D_MODEL]
    be2 = p_ref[ROW_LN:ROW_LN + 1, 3 * D_MODEL:4 * D_MODEL]
    y = (y - mu2) * jax.lax.rsqrt(var2 + LN_EPS) * g2 + be2

    o_ref[...] = y.astype(o_ref.dtype)


@jax.jit
def transformer_encoder_layer(src, kparams):
    """src: (S, B, D) float32 (PyTorch batch_first=False layout)."""
    S, B, D = src.shape
    n = S * B
    # (S, B, D) -> (S*B, D): free contiguous reshape, no transpose. The kernel's
    # packed block mask keeps attention within each batch element.
    x2d = src.reshape(n, D)

    out = pl.pallas_call(
        _encoder_layer_kernel,
        out_shape=jax.ShapeDtypeStruct((n, D), src.dtype),
        cost_estimate=pl.CostEstimate(
            flops=475_000, transcendentals=1_150, bytes_accessed=61_500),
    )(x2d, kparams["wslab"], kparams["pslab"])
    return out.reshape(S, B, D)


def init_params(key):
    # NOTE: if real PyTorch weights are ever loaded, nn.Linear stores (out, in)
    # so each weight must be transposed into this (in, out) convention first.
    ks = jax.random.split(key, 8)
    scale_d = 1.0 / math.sqrt(D_MODEL)
    scale_f = 1.0 / math.sqrt(D_FF)
    return {
        "wq": jax.random.normal(ks[0], (D_MODEL, D_MODEL), jnp.float32) * scale_d,
        "wk": jax.random.normal(ks[1], (D_MODEL, D_MODEL), jnp.float32) * scale_d,
        "wv": jax.random.normal(ks[2], (D_MODEL, D_MODEL), jnp.float32) * scale_d,
        "wo": jax.random.normal(ks[3], (D_MODEL, D_MODEL), jnp.float32) * scale_d,
        "w1": jax.random.normal(ks[4], (D_MODEL, D_FF), jnp.float32) * scale_d,
        "w2": jax.random.normal(ks[5], (D_FF, D_MODEL), jnp.float32) * scale_f,
        "bq": jnp.zeros((1, D_MODEL), jnp.float32),
        "bk": jnp.zeros((1, D_MODEL), jnp.float32),
        "bv": jnp.zeros((1, D_MODEL), jnp.float32),
        "bo": jnp.zeros((1, D_MODEL), jnp.float32),
        "b1": jnp.zeros((1, D_FF), jnp.float32),
        "b2": jnp.zeros((1, D_MODEL), jnp.float32),
        "ln1_g": jnp.ones((1, D_MODEL), jnp.float32),
        "ln1_b": jnp.zeros((1, D_MODEL), jnp.float32),
        "ln2_g": jnp.ones((1, D_MODEL), jnp.float32),
        "ln2_b": jnp.zeros((1, D_MODEL), jnp.float32),
    }


def prepare_params(p):
    """One-time (outside the hot path) packing of all parameters into two slabs.

    - Folds the 1/sqrt(d_head) softmax scale into the Q projection.
    - Folds Wo (and bo / bv) into the V projection per head:
        Wvo_h = Wv[:, h*dh:(h+1)*dh] @ Wo[h*dh:(h+1)*dh, :]
      so the kernel accumulates  attn += softmax(q_h k_h^T) @ (x @ Wvo_h + bvo_h).
    - Casts matmul weights to bf16 (biases/LN/mask stay f32).
    """
    D, H, dh = D_MODEL, NHEAD, D_HEAD
    scale = 1.0 / math.sqrt(dh)

    wq_s = p["wq"] * scale
    bq_s = p["bq"] * scale
    wvo = [p["wv"][:, h * dh:(h + 1) * dh] @ p["wo"][h * dh:(h + 1) * dh, :]
           for h in range(H)]
    bvo = [p["bv"][:, h * dh:(h + 1) * dh] @ p["wo"][h * dh:(h + 1) * dh, :]
           for h in range(H)]
    bvo[0] = bvo[0] + p["bo"]                      # bo passes through softmax rows (sum to 1)
    w_fused = jnp.concatenate([wq_s, p["wk"]] + wvo, axis=1)   # (32, 192)
    b_fused = jnp.concatenate([bq_s, p["bk"]] + bvo, axis=1)   # (1, 192)

    # ---- weight slab (bf16) ----
    wslab = jnp.zeros((WSLAB_ROWS, WSLAB_COLS), jnp.float32)
    wslab = wslab.at[0:D, 0:QKV_COLS].set(w_fused)
    wslab = wslab.at[W1_ROW:W1_ROW + D, 0:D_FF].set(p["w1"])
    wslab = wslab.at[0:D_FF, W2_COL:W2_COL + D].set(p["w2"])
    wslab = wslab.astype(jnp.bfloat16)

    # ---- bias / LayerNorm / mask slab (f32) ----
    # Trace-time-constant additive block mask: tokens are in (seq, batch) row
    # order, so batch id of row i is i % BATCH.
    ids = np.arange(N_TOKENS) % BATCH
    mask = np.where(ids[:, None] == ids[None, :], 0.0, -1e30).astype(np.float32)
    pslab = jnp.zeros((PSLAB_ROWS, PSLAB_COLS), jnp.float32)
    pslab = pslab.at[0:N_TOKENS, 0:N_TOKENS].set(jnp.asarray(mask))
    pslab = pslab.at[ROW_BIAS, 0:QKV_COLS].set(b_fused[0])
    pslab = pslab.at[ROW_VEC, 0:D_FF].set(p["b1"][0])
    pslab = pslab.at[ROW_VEC, D_FF:D_FF + D].set(p["b2"][0])
    pslab = pslab.at[ROW_LN, 0:D].set(p["ln1_g"][0])
    pslab = pslab.at[ROW_LN, D:2 * D].set(p["ln1_b"][0])
    pslab = pslab.at[ROW_LN, 2 * D:3 * D].set(p["ln2_g"][0])
    pslab = pslab.at[ROW_LN, 3 * D:4 * D].set(p["ln2_b"][0])

    return {"wslab": wslab, "pslab": pslab}


# ---------------- pure-JAX reference (for correctness check) ----------------
def _layer_norm(x, g, b):
    mu = jnp.mean(x, axis=-1, keepdims=True)
    var = jnp.mean((x - mu) ** 2, axis=-1, keepdims=True)
    return (x - mu) * jax.lax.rsqrt(var + LN_EPS) * g + b


def reference_layer(src, p):
    S, B, D = src.shape
    H, dh = NHEAD, D // NHEAD
    x = src.astype(jnp.float32)
    q = (x @ p["wq"] + p["bq"][0]).reshape(S, B, H, dh)
    k = (x @ p["wk"] + p["bk"][0]).reshape(S, B, H, dh)
    v = (x @ p["wv"] + p["bv"][0]).reshape(S, B, H, dh)
    s = jnp.einsum("sbhd,tbhd->bhst", q, k) / math.sqrt(dh)
    pr = jax.nn.softmax(s, axis=-1)
    ctx = jnp.einsum("bhst,tbhd->sbhd", pr, v).reshape(S, B, D)
    attn = ctx @ p["wo"] + p["bo"][0]
    h1 = _layer_norm(x + attn, p["ln1_g"][0], p["ln1_b"][0])
    f = jnp.maximum(h1 @ p["w1"] + p["b1"][0], 0.0)
    f = f @ p["w2"] + p["b2"][0]
    return _layer_norm(h1 + f, p["ln2_g"][0], p["ln2_b"][0])


if __name__ == "__main__":
    key = jax.random.PRNGKey(0)
    k_src, k_par = jax.random.split(key)
    # PyTorch batch_first=False: src is (S, B, D)
    src = jax.random.normal(k_src, (SEQ, BATCH, D_MODEL), jnp.float32)
    params = init_params(k_par)
    kparams = prepare_params(params)

    out = transformer_encoder_layer(src, kparams)
    jax.block_until_ready(out)

    assert out.shape == (SEQ, BATCH, D_MODEL)
    assert bool(jnp.all(jnp.isfinite(out)))
    ref = reference_layer(src, params)
    max_err = float(jnp.max(jnp.abs(out - ref)))
    # bf16 weights + bf16-cast matmul inputs (f32 accumulate) vs. an all-f32
    # reference; the softmax reciprocal is exact.
    assert max_err < 5e-2, max_err
    # TODO(synk): dropout layers (dropout_rate=0.1) are identity in eval mode and
    # are therefore omitted from the kernel.
    print("KERNEL_OK")
</pallas_src>

<mosaic_0001>
module attributes {stable_mosaic.version = 11 : i64} {
  func.func @_encoder_layer_kernel(%arg0: memref<16x32xf32, #tpu.memory_space<vmem>>, %arg1: memref<64x256xbf16, #tpu.memory_space<vmem>>, %arg2: memref<24x256xf32, #tpu.memory_space<vmem>>, %arg3: memref<16x32xf32, #tpu.memory_space<vmem>>) attributes {dimension_semantics = [], scalar_prefetch = 0 : i64, scratch_operands = 0 : i64, tpu.core_type = #tpu.core_type<tc>} {
    %c0 = arith.constant 0 : index
    %c0_0 = arith.constant 0 : index
    %0 = vector.load %arg0[%c0, %c0_0] : memref<16x32xf32, #tpu.memory_space<vmem>>, vector<16x32xf32>
    %1 = arith.truncf %0 : vector<16x32xf32> to vector<16x32xbf16>
    %c0_1 = arith.constant 0 : index
    %c0_2 = arith.constant 0 : index
    %2 = vector.load %arg1[%c0_1, %c0_2] : memref<64x256xbf16, #tpu.memory_space<vmem>>, vector<32x256xbf16>
    %cst = arith.constant dense<0.000000e+00> : vector<16x256xf32>
    %3 = tpu.matmul %1, %2, %cst {dimension_numbers = #tpu.dot_dimension_numbers<[1], [0], [0], [1], [0, 0, 1, 1], [], []>} : vector<16x32xbf16>, vector<32x256xbf16>, vector<16x256xf32> -> vector<16x256xf32>
    %c16 = arith.constant 16 : index
    %c0_3 = arith.constant 0 : index
    %4 = vector.load %arg2[%c16, %c0_3] : memref<24x256xf32, #tpu.memory_space<vmem>>, vector<1x256xf32>
    %5 = vector.broadcast %4 : vector<1x256xf32> to vector<16x256xf32>
    %6 = arith.addf %3, %5 : vector<16x256xf32>
    %c0_4 = arith.constant 0 : index
    %c0_5 = arith.constant 0 : index
    %7 = vector.load %arg2[%c0_4, %c0_5] : memref<24x256xf32, #tpu.memory_space<vmem>>, vector<16x16xf32>
    %cst_6 = arith.constant 0.000000e+00 : f32
    %8 = vector.broadcast %cst_6 : f32 to vector<16x32xf32>
    %9 = vector.extract_strided_slice %6 {offsets = [0, 0], sizes = [16, 8], strides = [1, 1]} : vector<16x256xf32> to vector<16x8xf32>
    %10 = vector.extract_strided_slice %6 {offsets = [0, 32], sizes = [16, 8], strides = [1, 1]} : vector<16x256xf32> to vector<16x8xf32>
    %11 = vector.extract_strided_slice %6 {offsets = [0, 64], sizes = [16, 32], strides = [1, 1]} : vector<16x256xf32> to vector<16x32xf32>
    %cst_7 = arith.constant dense<0.000000e+00> : vector<16x16xf32>
    %12 = tpu.matmul %9, %10, %cst_7 {dimension_numbers = #tpu.dot_dimension_numbers<[1], [1], [0], [0], [0, 0, 1, 0], [], []>} : vector<16x8xf32>, vector<16x8xf32>, vector<16x16xf32> -> vector<16x16xf32>
    %13 = arith.addf %12, %7 : vector<16x16xf32>
    %cst_8 = arith.constant dense<0xFF800000> : vector<16xf32>
    %14 = vector.multi_reduction <maximumf>, %13, %cst_8 [1] : vector<16x16xf32> to vector<16xf32>
    %15 = vector.shape_cast %14 : vector<16xf32> to vector<16x1xf32>
    %16 = vector.broadcast %15 : vector<16x1xf32> to vector<16x16xf32>
    %17 = arith.subf %13, %16 : vector<16x16xf32>
    %18 = math.exp %17 : vector<16x16xf32>
    %cst_9 = arith.constant dense<0.000000e+00> : vector<16xf32>
    %19 = vector.multi_reduction <add>, %18, %cst_9 [1] : vector<16x16xf32> to vector<16xf32>
    %20 = vector.shape_cast %19 : vector<16xf32> to vector<16x1xf32>
    %cst_10 = arith.constant dense<0.000000e+00> : vector<16x32xf32>
    %21 = tpu.matmul %18, %11, %cst_10 {dimension_numbers = #tpu.dot_dimension_numbers<[1], [0], [0], [1], [0, 0, 1, 1], [], []>} : vector<16x16xf32>, vector<16x32xf32>, vector<16x32xf32> -> vector<16x32xf32>
    %22 = tpu.reciprocal %20 : vector<16x1xf32> -> vector<16x1xf32>
    %23 = vector.broadcast %22 : vector<16x1xf32> to vector<16x32xf32>
    %24 = arith.mulf %21, %23 : vector<16x32xf32>
    %25 = arith.addf %8, %24 : vector<16x32xf32>
    %26 = vector.extract_strided_slice %6 {offsets = [0, 8], sizes = [16, 8], strides = [1, 1]} : vector<16x256xf32> to vector<16x8xf32>
    %27 = vector.extract_strided_slice %6 {offsets = [0, 40], sizes = [16, 8], strides = [1, 1]} : vector<16x256xf32> to vector<16x8xf32>
    %28 = vector.extract_strided_slice %6 {offsets = [0, 96], sizes = [16, 32], strides = [1, 1]} : vector<16x256xf32> to vector<16x32xf32>
    %cst_11 = arith.constant dense<0.000000e+00> : vector<16x16xf32>
    %29 = tpu.matmul %26, %27, %cst_11 {dimension_numbers = #tpu.dot_dimension_numbers<[1], [1], [0], [0], [0, 0, 1, 0], [], []>} : vector<16x8xf32>, vector<16x8xf32>, vector<16x16xf32> -> vector<16x16xf32>
    %30 = arith.addf %29, %7 : vector<16x16xf32>
    %cst_12 = arith.constant dense<0xFF800000> : vector<16xf32>
    %31 = vector.multi_reduction <maximumf>, %30, %cst_12 [1] : vector<16x16xf32> to vector<16xf32>
    %32 = vector.shape_cast %31 : vector<16xf32> to vector<16x1xf32>
    %33 = vector.broadcast %32 : vector<16x1xf32> to vector<16x16xf32>
    %34 = arith.subf %30, %33 : vector<16x16xf32>
    %35 = math.exp %34 : vector<16x16xf32>
    %cst_13 = arith.constant dense<0.000000e+00> : vector<16xf32>
    %36 = vector.multi_reduction <add>, %35, %cst_13 [1] : vector<16x16xf32> to vector<16xf32>
    %37 = vector.shape_cast %36 : vector<16xf32> to vector<16x1xf32>
    %cst_14 = arith.constant dense<0.000000e+00> : vector<16x32xf32>
    %38 = tpu.matmul %35, %28, %cst_14 {dimension_numbers = #tpu.dot_dimension_numbers<[1], [0], [0], [1], [0, 0, 1, 1], [], []>} : vector<16x16xf32>, vector<16x32xf32>, vector<16x32xf32> -> vector<16x32xf32>
    %39 = tpu.reciprocal %37 : vector<16x1xf32> -> vector<16x1xf32>
    %40 = vector.broadcast %39 : vector<16x1xf32> to vector<16x32xf32>
    %41 = arith.mulf %38, %40 : vector<16x32xf32>
    %42 = arith.addf %25, %41 : vector<16x32xf32>
    %43 = vector.extract_strided_slice %6 {offsets = [0, 16], sizes = [16, 8], strides = [1, 1]} : vector<16x256xf32> to vector<16x8xf32>
    %44 = vector.extract_strided_slice %6 {offsets = [0, 48], sizes = [16, 8], strides = [1, 1]} : vector<16x256xf32> to vector<16x8xf32>
    %45 = vector.extract_strided_slice %6 {offsets = [0, 128], sizes = [16, 32], strides = [1, 1]} : vector<16x256xf32> to vector<16x32xf32>
    %cst_15 = arith.constant dense<0.000000e+00> : vector<16x16xf32>
    %46 = tpu.matmul %43, %44, %cst_15 {dimension_numbers = #tpu.dot_dimension_numbers<[1], [1], [0], [0], [0, 0, 1, 0], [], []>} : vector<16x8xf32>, vector<16x8xf32>, vector<16x16xf32> -> vector<16x16xf32>
    %47 = arith.addf %46, %7 : vector<16x16xf32>
    %cst_16 = arith.constant dense<0xFF800000> : vector<16xf32>
    %48 = vector.multi_reduction <maximumf>, %47, %cst_16 [1] : vector<16x16xf32> to vector<16xf32>
    %49 = vector.shape_cast %48 : vector<16xf32> to vector<16x1xf32>
    %50 = vector.broadcast %49 : vector<16x1xf32> to vector<16x16xf32>
    %51 = arith.subf %47, %50 : vector<16x16xf32>
    %52 = math.exp %51 : vector<16x16xf32>
    %cst_17 = arith.constant dense<0.000000e+00> : vector<16xf32>
    %53 = vector.multi_reduction <add>, %52, %cst_17 [1] : vector<16x16xf32> to vector<16xf32>
    %54 = vector.shape_cast %53 : vector<16xf32> to vector<16x1xf32>
    %cst_18 = arith.constant dense<0.000000e+00> : vector<16x32xf32>
    %55 = tpu.matmul %52, %45, %cst_18 {dimension_numbers = #tpu.dot_dimension_numbers<[1], [0], [0], [1], [0, 0, 1, 1], [], []>} : vector<16x16xf32>, vector<16x32xf32>, vector<16x32xf32> -> vector<16x32xf32>
    %56 = tpu.reciprocal %54 : vector<16x1xf32> -> vector<16x1xf32>
    %57 = vector.broadcast %56 : vector<16x1xf32> to vector<16x32xf32>
    %58 = arith.mulf %55, %57 : vector<16x32xf32>
    %59 = arith.addf %42, %58 : vector<16x32xf32>
    %60 = vector.extract_strided_slice %6 {offsets = [0, 24], sizes = [16, 8], strides = [1, 1]} : vector<16x256xf32> to vector<16x8xf32>
    %61 = vector.extract_strided_slice %6 {offsets = [0, 56], sizes = [16, 8], strides = [1, 1]} : vector<16x256xf32> to vector<16x8xf32>
    %62 = vector.extract_strided_slice %6 {offsets = [0, 160], sizes = [16, 32], strides = [1, 1]} : vector<16x256xf32> to vector<16x32xf32>
    %cst_19 = arith.constant dense<0.000000e+00> : vector<16x16xf32>
    %63 = tpu.matmul %60, %61, %cst_19 {dimension_numbers = #tpu.dot_dimension_numbers<[1], [1], [0], [0], [0, 0, 1, 0], [], []>} : vector<16x8xf32>, vector<16x8xf32>, vector<16x16xf32> -> vector<16x16xf32>
    %64 = arith.addf %63, %7 : vector<16x16xf32>
    %cst_20 = arith.constant dense<0xFF800000> : vector<16xf32>
    %65 = vector.multi_reduction <maximumf>, %64, %cst_20 [1] : vector<16x16xf32> to vector<16xf32>
    %66 = vector.shape_cast %65 : vector<16xf32> to vector<16x1xf32>
    %67 = vector.broadcast %66 : vector<16x1xf32> to vector<16x16xf32>
    %68 = arith.subf %64, %67 : vector<16x16xf32>
    %69 = math.exp %68 : vector<16x16xf32>
    %cst_21 = arith.constant dense<0.000000e+00> : vector<16xf32>
    %70 = vector.multi_reduction <add>, %69, %cst_21 [1] : vector<16x16xf32> to vector<16xf32>
    %71 = vector.shape_cast %70 : vector<16xf32> to vector<16x1xf32>
    %cst_22 = arith.constant dense<0.000000e+00> : vector<16x32xf32>
    %72 = tpu.matmul %69, %62, %cst_22 {dimension_numbers = #tpu.dot_dimension_numbers<[1], [0], [0], [1], [0, 0, 1, 1], [], []>} : vector<16x16xf32>, vector<16x32xf32>, vector<16x32xf32> -> vector<16x32xf32>
    %73 = tpu.reciprocal %71 : vector<16x1xf32> -> vector<16x1xf32>
    %74 = vector.broadcast %73 : vector<16x1xf32> to vector<16x32xf32>
    %75 = arith.mulf %72, %74 : vector<16x32xf32>
    %76 = arith.addf %59, %75 : vector<16x32xf32>
    %77 = arith.addf %0, %76 : vector<16x32xf32>
    %cst_23 = arith.constant dense<0.000000e+00> : vector<16xf32>
    %78 = vector.multi_reduction <add>, %77, %cst_23 [1] : vector<16x32xf32> to vector<16xf32>
    %79 = vector.shape_cast %78 : vector<16xf32> to vector<16x1xf32>
    %cst_24 = arith.constant 3.200000e+01 : f32
    %80 = vector.broadcast %cst_24 : f32 to vector<16x1xf32>
    %81 = arith.divf %79, %80 : vector<16x1xf32>
    %82 = vector.broadcast %81 : vector<16x1xf32> to vector<16x32xf32>
    %83 = arith.subf %77, %82 : vector<16x32xf32>
    %84 = arith.mulf %83, %83 : vector<16x32xf32>
    %cst_25 = arith.constant dense<0.000000e+00> : vector<16xf32>
    %85 = vector.multi_reduction <add>, %84, %cst_25 [1] : vector<16x32xf32> to vector<16xf32>
    %86 = vector.shape_cast %85 : vector<16xf32> to vector<16x1xf32>
    %cst_26 = arith.constant 3.200000e+01 : f32
    %87 = vector.broadcast %cst_26 : f32 to vector<16x1xf32>
    %88 = arith.divf %86, %87 : vector<16x1xf32>
    %c18 = arith.constant 18 : index
    %c0_27 = arith.constant 0 : index
    %89 = vector.load %arg2[%c18, %c0_27] : memref<24x256xf32, #tpu.memory_space<vmem>>, vector<1x32xf32>
    %c18_28 = arith.constant 18 : index
    %c32 = arith.constant 32 : index
    %90 = vector.load %arg2[%c18_28, %c32] : memref<24x256xf32, #tpu.memory_space<vmem>>, vector<1x32xf32>
    %91 = vector.broadcast %81 : vector<16x1xf32> to vector<16x32xf32>
    %92 = arith.subf %77, %91 : vector<16x32xf32>
    %cst_29 = arith.constant 9.99999974E-6 : f32
    %93 = vector.broadcast %cst_29 : f32 to vector<16x1xf32>
    %94 = arith.addf %88, %93 : vector<16x1xf32>
    %95 = math.rsqrt %94 : vector<16x1xf32>
    %96 = vector.broadcast %95 : vector<16x1xf32> to vector<16x32xf32>
    %97 = arith.mulf %92, %96 : vector<16x32xf32>
    %98 = vector.broadcast %89 : vector<1x32xf32> to vector<16x32xf32>
    %99 = arith.mulf %97, %98 : vector<16x32xf32>
    %100 = vector.broadcast %90 : vector<1x32xf32> to vector<16x32xf32>
    %101 = arith.addf %99, %100 : vector<16x32xf32>
    %c32_30 = arith.constant 32 : index
    %c0_31 = arith.constant 0 : index
    %102 = vector.load %arg1[%c32_30, %c0_31] : memref<64x256xbf16, #tpu.memory_space<vmem>>, vector<32x64xbf16>
    %c0_32 = arith.constant 0 : index
    %c192 = arith.constant 192 : index
    %103 = vector.load %arg1[%c0_32, %c192] : memref<64x256xbf16, #tpu.memory_space<vmem>>, vector<64x32xbf16>
    %c17 = arith.constant 17 : index
    %c0_33 = arith.constant 0 : index
    %104 = vector.load %arg2[%c17, %c0_33] : memref<24x256xf32, #tpu.memory_space<vmem>>, vector<1x64xf32>
    %c17_34 = arith.constant 17 : index
    %c64 = arith.constant 64 : index
    %105 = vector.load %arg2[%c17_34, %c64] : memref<24x256xf32, #tpu.memory_space<vmem>>, vector<1x32xf32>
    %106 = arith.truncf %101 : vector<16x32xf32> to vector<16x32xbf16>
    %cst_35 = arith.constant dense<0.000000e+00> : vector<16x64xf32>
    %107 = tpu.matmul %106, %102, %cst_35 {dimension_numbers = #tpu.dot_dimension_numbers<[1], [0], [0], [1], [0, 0, 1, 1], [], []>} : vector<16x32xbf16>, vector<32x64xbf16>, vector<16x64xf32> -> vector<16x64xf32>
    %108 = vector.broadcast %104 : vector<1x64xf32> to vector<16x64xf32>
    %109 = arith.addf %107, %108 : vector<16x64xf32>
    %cst_36 = arith.constant 0.000000e+00 : f32
    %110 = vector.broadcast %cst_36 : f32 to vector<16x64xf32>
    %111 = arith.maximumf %109, %110 : vector<16x64xf32>
    %112 = arith.truncf %111 : vector<16x64xf32> to vector<16x64xbf16>
    %cst_37 = arith.constant dense<0.000000e+00> : vector<16x32xf32>
    %113 = tpu.matmul %112, %103, %cst_37 {dimension_numbers = #tpu.dot_dimension_numbers<[1], [0], [0], [1], [0, 0, 1, 1], [], []>} : vector<16x64xbf16>, vector<64x32xbf16>, vector<16x32xf32> -> vector<16x32xf32>
    %114 = vector.broadcast %105 : vector<1x32xf32> to vector<16x32xf32>
    %115 = arith.addf %113, %114 : vector<16x32xf32>
    %116 = arith.addf %101, %115 : vector<16x32xf32>
    %cst_38 = arith.constant dense<0.000000e+00> : vector<16xf32>
    %117 = vector.multi_reduction <add>, %116, %cst_38 [1] : vector<16x32xf32> to vector<16xf32>
    %118 = vector.shape_cast %117 : vector<16xf32> to vector<16x1xf32>
    %cst_39 = arith.constant 3.200000e+01 : f32
    %119 = vector.broadcast %cst_39 : f32 to vector<16x1xf32>
    %120 = arith.divf %118, %119 : vector<16x1xf32>
    %121 = vector.broadcast %120 : vector<16x1xf32> to vector<16x32xf32>
    %122 = arith.subf %116, %121 : vector<16x32xf32>
    %123 = arith.mulf %122, %122 : vector<16x32xf32>
    %cst_40 = arith.constant dense<0.000000e+00> : vector<16xf32>
    %124 = vector.multi_reduction <add>, %123, %cst_40 [1] : vector<16x32xf32> to vector<16xf32>
    %125 = vector.shape_cast %124 : vector<16xf32> to vector<16x1xf32>
    %cst_41 = arith.constant 3.200000e+01 : f32
    %126 = vector.broadcast %cst_41 : f32 to vector<16x1xf32>
    %127 = arith.divf %125, %126 : vector<16x1xf32>
    %c18_42 = arith.constant 18 : index
    %c64_43 = arith.constant 64 : index
    %128 = vector.load %arg2[%c18_42, %c64_43] : memref<24x256xf32, #tpu.memory_space<vmem>>, vector<1x32xf32>
    %c18_44 = arith.constant 18 : index
    %c96 = arith.constant 96 : index
    %129 = vector.load %arg2[%c18_44, %c96] : memref<24x256xf32, #tpu.memory_space<vmem>>, vector<1x32xf32>
    %130 = vector.broadcast %120 : vector<16x1xf32> to vector<16x32xf32>
    %131 = arith.subf %116, %130 : vector<16x32xf32>
    %cst_45 = arith.constant 9.99999974E-6 : f32
    %132 = vector.broadcast %cst_45 : f32 to vector<16x1xf32>
    %133 = arith.addf %127, %132 : vector<16x1xf32>
    %134 = math.rsqrt %133 : vector<16x1xf32>
    %135 = vector.broadcast %134 : vector<16x1xf32> to vector<16x32xf32>
    %136 = arith.mulf %131, %135 : vector<16x32xf32>
    %137 = vector.broadcast %128 : vector<1x32xf32> to vector<16x32xf32>
    %138 = arith.mulf %136, %137 : vector<16x32xf32>
    %139 = vector.broadcast %129 : vector<1x32xf32> to vector<16x32xf32>
    %140 = arith.addf %138, %139 : vector<16x32xf32>
    %c0_46 = arith.constant 0 : index
    %c0_47 = arith.constant 0 : index
    %141 = vector.load %arg3[%c0_46, %c0_47] : memref<16x32xf32, #tpu.memory_space<vmem>>, vector<16x32xf32>
    tpu.vector_store %arg3[%c0_46, %c0_47], %140 {strides = array<i32>} : memref<16x32xf32, #tpu.memory_space<vmem>>, vector<16x32xf32>,
    return
  }
}

</mosaic_0001>

<llo_original>
// kernel: transformer_encoder_layer.1
$region0: #{transformer_encoder_layer.1}
  #allocation0 [shape = 'u32[]', space=smem, size = 0x4, offset = 0x4, fixed_abs, tag = 'smem constant byte address 0x4 - core index']
  #allocation1 [shape = 'u32[144,128]{1,0:T(1,128)}', space=vmem, size = 0x12000, scoped, tag = 'internal scratch']
  %s0 = inlined_call_operand.hbm [shape: f32[16,32], index: 0, kind: input, shape index: {}]
  %s1 = inlined_call_operand.hbm [shape: bf16[64,256], index: 1, kind: input, shape index: {}]
  %s2 = inlined_call_operand.hbm [shape: f32[24,256], index: 2, kind: input, shape index: {}]
  %s3 = inlined_call_operand.hbm [shape: f32[16,32], index: 3, kind: output, shape index: {}]
  %s4 = sld [smem:[#allocation0]]
  $region34: #{transformer_encoder_layer.1} parent=0
    _
  %s6 = ssub.s32 1, %s4
  %s7 = scalar_select 0, %s6, %s4
  $region1: #{transformer_encoder_layer.1} parent=0
    #allocation2 [shape = 'u8[8192]{0}', space=vmem, size = 0x2000, scoped, tag = 'input window, operand 0, single buffered']
    #allocation3 [shape = 's32[1]{0}', space=sflag, size = 0x4, scoped, tag = 'scoped memory for transformer_encoder_layer.1']
    #allocation4 [shape = 's32[1]{0}', space=sflag, size = 0x4, scoped, tag = 'scoped memory for transformer_encoder_layer.1']
    #allocation5 [shape = 'u8[32768]{0}', space=vmem, size = 0x8000, scoped, tag = 'input window, operand 1, single buffered']
    #allocation6 [shape = 's32[1]{0}', space=sflag, size = 0x4, scoped, tag = 'scoped memory for transformer_encoder_layer.1']
    #allocation7 [shape = 'u8[24576]{0}', space=vmem, size = 0x6000, scoped, tag = 'input window, operand 2, single buffered']
    #allocation8 [shape = 'u8[8192]{0}', space=vmem, size = 0x2000, scoped, tag = 'output window, operand 0, single buffered']
    %8 = vsyncpa [#allocation3], 0
    %9 = vsyncpa [#allocation6], 0
    %10 = vsyncpa [#allocation4], 0
    // Predicated region
    $region2: #{transformer_encoder_layer.1} parent=1 // pred_check
      _
    $region3: #{transformer_encoder_layer.1} parent=1 // pred_check_branch
      %12 = sbr.rel (0) target = $region5
    $region4: #{transformer_encoder_layer.1} parent=1 // pred_region
      %s14 = ssub.s32 256, 256
      %15 = vsyncadd [#allocation3], %s14
      %s16 = sshll.u32 [#allocation2], 4
      %s17 = int_to_ptr.vmem [resolvable:$true] %s16
      %22 = dma.hbm_to_vmem [thread:$0]  %s0, 256, %s17, [#allocation3], 128, 128, 8
    $region5: #{transformer_encoder_layer.1} parent=1 // pred_fallthru
      _
    // Predicated region
    $region6: #{transformer_encoder_layer.1} parent=1 // pred_check
      _
    $region7: #{transformer_encoder_layer.1} parent=1 // pred_check_branch
      %24 = sbr.rel (0) target = $region9
    $region8: #{transformer_encoder_layer.1} parent=1 // pred_region
      %s26 = ssub.s32 1024, 1024
      %27 = vsyncadd [#allocation6], %s26
      %s28 = sshll.u32 [#allocation5], 4
      %s29 = int_to_ptr.vmem [resolvable:$true] %s28
      %34 = dma.hbm_to_vmem [thread:$0]  %s1, 1024, %s29, [#allocation6], 128, 128, 8
    $region9: #{transformer_encoder_layer.1} parent=1 // pred_fallthru
      _
    // Predicated region
    $region10: #{transformer_encoder_layer.1} parent=1 // pred_check
      _
    $region11: #{transformer_encoder_layer.1} parent=1 // pred_check_branch
      %36 = sbr.rel (0) target = $region13
    $region12: #{transformer_encoder_layer.1} parent=1 // pred_region
      %s38 = ssub.s32 768, 768
      %39 = vsyncadd [#allocation6], %s38
      %s40 = sshll.u32 [#allocation7], 4
      %s41 = int_to_ptr.vmem [resolvable:$true] %s40
      %46 = dma.hbm_to_vmem [thread:$0]  %s2, 768, %s41, [#allocation6], 256, 256, 16
    $region13: #{transformer_encoder_layer.1} parent=1 // pred_fallthru
      _
    // Predicated region
    $region14: #{transformer_encoder_layer.1} parent=1 // pred_check
      _
    $region15: #{transformer_encoder_layer.1} parent=1 // pred_check_branch
      %48 = sbr.rel (0) target = $region17
    $region16: #{transformer_encoder_layer.1} parent=1 // pred_region
      %49 = dma.done [#allocation3], 256
    $region17: #{transformer_encoder_layer.1} parent=1 // pred_fallthru
      _
    // Predicated region
    $region18: #{transformer_encoder_layer.1} parent=1 // pred_check
      _
    $region19: #{transformer_encoder_layer.1} parent=1 // pred_check_branch
      %51 = sbr.rel (0) target = $region21
    $region20: #{transformer_encoder_layer.1} parent=1 // pred_region
      %52 = dma.done [#allocation6], 1024
    $region21: #{transformer_encoder_layer.1} parent=1 // pred_fallthru
      _
    // Predicated region
    $region22: #{transformer_encoder_layer.1} parent=1 // pred_check
      _
    $region23: #{transformer_encoder_layer.1} parent=1 // pred_check_branch
      %54 = sbr.rel (0) target = $region25
    $region24: #{transformer_encoder_layer.1} parent=1 // pred_region
      %55 = dma.done [#allocation6], 768
    $region25: #{transformer_encoder_layer.1} parent=1 // pred_fallthru
      _
    %v57 = vld [vmem:[#allocation2] sm:$0xff]
    %v58 = vld [vmem:[#allocation2 + $0x8] sm:$0xff]
    %v59 = vpack.c.bf16 %v58, %v57
    %v60 = vld [vmem:[#allocation5] sm:$0xff]
    %v61 = vld [vmem:[#allocation5 + $0x8] sm:$0xff]
    %v62 = vld [vmem:[#allocation5 + $0x10] sm:$0xff]
    %v63 = vld [vmem:[#allocation5 + $0x18] sm:$0xff]
    %s64 = scalar_lea.vmem [#allocation7], 32
    %v65 = vld [vmem:[%s64] ss:$8 sm:$0x3]
    %v67 = vlaneseq
    %v68 = vshrl.u32 %v67, 7
    %v69 = vsub.s32 0, %v68
    %v70 = vrot.slane %v65, %v69
    %v71 = vlaneseq
    %v72 = vshrl.u32 %v71, 7
    %v73 = vsub.s32 1, %v72
    %v74 = vrot.slane %v65, %v73
    %v81 = vunpack.c.l.b16 %v60
    %v82 = vunpack.c.h.b16 %v60
    %v83 = vunpack.c.l.b16 %v61
    %v84 = vunpack.c.h.b16 %v61
    %v85 = vunpack.c.l.b16 %v62
    %v86 = vunpack.c.h.b16 %v62
    %v87 = vunpack.c.l.b16 %v63
    %v88 = vunpack.c.h.b16 %v63
    %v89 = vpack.c.b16 %v83, %v81
    %v90 = vpack.c.b16 %v84, %v82
    %v91 = vpack.c.b16 %v87, %v85
    %v92 = vpack.c.b16 %v88, %v86
    %vm97 = vcmask 261120
    %v99 = vsel %vm97, %v59, 0
    %101 = vmatprep.subr.bf16.mxu0 %v90
    %102 = vmatpush1.bf16.msra.mxu0 %v89
    %103 = vmatprep.subr.bf16.mxu0 %v92
    %104 = vmatpush1.bf16.msra.mxu0 %v91
    %105 = vmatprep.subr.bf16.mxu0 0
    %106 = vmatpush1.bf16.msra.mxu0 0
    %107 = vmatprep.subr.bf16.mxu0 0
    %108 = vmatpush1.bf16.msra.mxu0 0
    %109 = vmatprep.subr.bf16.mxu0 0
    %110 = vmatpush1.bf16.msra.mxu0 0
    %111 = vmatprep.subr.bf16.mxu0 0
    %112 = vmatpush1.bf16.msra.mxu0 0
    %113 = vmatprep.subr.bf16.mxu0 0
    %114 = vmatpush1.bf16.msra.mxu0 0
    %115 = vmatprep.subr.bf16.mxu0 0
    %116 = vmatpush1.bf16.msra.mxu0 0
    %117 = vmatprep.subr.bf16.mxu0 0
    %118 = vmatpush1.bf16.msra.mxu0 0
    %119 = vmatprep.subr.bf16.mxu0 0
    %120 = vmatpush1.bf16.msra.mxu0 0
    %121 = vmatprep.subr.bf16.mxu0 0
    %122 = vmatpush1.bf16.msra.mxu0 0
    %123 = vmatprep.subr.bf16.mxu0 0
    %124 = vmatpush1.bf16.msra.mxu0 0
    %125 = vmatprep.subr.bf16.mxu0 0
    %126 = vmatpush1.bf16.msra.mxu0 0
    %127 = vmatprep.subr.bf16.mxu0 0
    %128 = vmatpush1.bf16.msra.mxu0 0
    %129 = vmatprep.subr.bf16.mxu0 0
    %130 = vmatpush1.bf16.msra.mxu0 0
    %131 = vmatprep.subr.bf16.mxu0 0
    %132 = vmatpush1.bf16.msra.mxu0 0
    %133 = vmatprep.mubr.bf16.mxu0 0
    %134 = vmatmul.mubr.bf16.gmra.mrb[0].mxu0 %v99
    %v135 = vpop.f32.mrb[0].mxu0
    %v136 = vadd.f32 %v70, %v135
    %v137 = vpop.f32.mrb[0].mxu0
    %v138 = vadd.f32 %v74, %v137
    %v139 = vpop.f32.mrb[0].mxu0
    %v140 = vadd.f32 %v70, %v139
    %v141 = vpop.f32.mrb[0].mxu0
    %v142 = vadd.f32 %v74, %v141
    %143 = vdwg.mxu0
    %v144 = vld [vmem:[#allocation7] sm:$0xff]
    %v145 = vld [vmem:[#allocation7 + $0x10] sm:$0xff]
    %148 = vrot.lane.b32.xlu0 %v136, 96
    %v149 = vpop.permute.xlu0 %148
    %150 = vrot.lane.b32.xlu0 %v140, 96
    %v151 = vpop.permute.xlu0 %150
    %vm152 = vcmask 64512
    %v153 = vsel %vm152, %v136, 0
    %v155 = vsel %vm152, %v140, 0
    %v157 = vsel %vm152, %v149, 0
    %v159 = vsel %vm152, %v151, 0
    %161 = vmatprep.subr.mxu0 0.0
    %162 = vmatpush1.xpose.msra.mxu0 %v157
    %163 = vmatprep.subr.mxu0 0.0
    %164 = vmatpush1.xpose.msra.mxu0 %v159
    %165 = vmatprep.subr.mxu0 0.0
    %166 = vmatpush1.xpose.msra.mxu0 0.0
    %167 = vmatprep.subr.mxu0 0.0
    %168 = vmatpush1.xpose.msra.mxu0 0.0
    %169 = vmatprep.subr.mxu0 0.0
    %170 = vmatpush1.xpose.msra.mxu0 0.0
    %171 = vmatprep.subr.mxu0 0.0
    %172 = vmatpush1.xpose.msra.mxu0 0.0
    %173 = vmatprep.subr.mxu0 0.0
    %174 = vmatpush1.xpose.msra.mxu0 0.0
    %175 = vmatprep.subr.mxu0 0.0
    %176 = vmatpush1.xpose.msra.mxu0 0.0
    %177 = vmatprep.subr.mxu0 0.0
    %178 = vmatpush1.xpose.msra.mxu0 0.0
    %179 = vmatprep.subr.mxu0 0.0
    %180 = vmatpush1.xpose.msra.mxu0 0.0
    %181 = vmatprep.subr.mxu0 0.0
    %182 = vmatpush1.xpose.msra.mxu0 0.0
    %183 = vmatprep.subr.mxu0 0.0
    %184 = vmatpush1.xpose.msra.mxu0 0.0
    %185 = vmatprep.subr.mxu0 0.0
    %186 = vmatpush1.xpose.msra.mxu0 0.0
    %187 = vmatprep.subr.mxu0 0.0
    %188 = vmatpush1.xpose.msra.mxu0 0.0
    %189 = vmatprep.subr.mxu0 0.0
    %190 = vmatpush1.xpose.msra.mxu0 0.0
    %191 = vmatprep.subr.mxu0 0.0
    %192 = vmatpush1.xpose.msra.mxu0 0.0
    %193 = vmatprep.subr.mxu0 0.0
    %194 = vmatpush1.xpose.msra.mxu0 0.0
    %195 = vmatprep.subr.mxu0 0.0
    %196 = vmatpush1.xpose.msra.mxu0 0.0
    %197 = vmatprep.subr.mxu0 0.0
    %198 = vmatpush1.xpose.msra.mxu0 0.0
    %199 = vmatprep.subr.mxu0 0.0
    %200 = vmatpush1.xpose.msra.mxu0 0.0
    %201 = vmatprep.subr.mxu0 0.0
    %202 = vmatpush1.xpose.msra.mxu0 0.0
    %203 = vmatprep.subr.mxu0 0.0
    %204 = vmatpush1.xpose.msra.mxu0 0.0
    %205 = vmatprep.subr.mxu0 0.0
    %206 = vmatpush1.xpose.msra.mxu0 0.0
    %207 = vmatprep.subr.mxu0 0.0
    %208 = vmatpush1.xpose.msra.mxu0 0.0
    %209 = vmatprep.subr.mxu0 0.0
    %210 = vmatpush1.xpose.msra.mxu0 0.0
    %211 = vmatprep.subr.mxu0 0.0
    %212 = vmatpush1.xpose.msra.mxu0 0.0
    %213 = vmatprep.subr.mxu0 0.0
    %214 = vmatpush1.xpose.msra.mxu0 0.0
    %215 = vmatprep.subr.mxu0 0.0
    %216 = vmatpush1.xpose.msra.mxu0 0.0
    %217 = vmatprep.subr.mxu0 0.0
    %218 = vmatpush1.xpose.msra.mxu0 0.0
    %219 = vmatprep.subr.mxu0 0.0
    %220 = vmatpush1.xpose.msra.mxu0 0.0
    %221 = vmatprep.subr.mxu0 0.0
    %222 = vmatpush1.xpose.msra.mxu0 0.0
    %223 = vmatprep.subr.mxu0 0.0
    %224 = vmatpush1.xpose.msra.mxu0 0.0
    %225 = vmatprep.mubr.f32.mxu0 0.0
    %226 = vmatmul.mubr.f32.gmra.mrb[0].mxu0 %v153
    %v227 = vpop.f32.mrb[0].mxu0
    %v228 = vadd.f32 %v144, %v227
    %v229 = vpop.f32.mrb[0].mxu0
    %230 = vmatprep.mubr.f32.mxu0 0.0
    %231 = vmatmul.mubr.f32.gmra.mrb[0].mxu0 %v155
    %v232 = vpop.f32.mrb[0].mxu0
    %v233 = vadd.f32 %v145, %v232
    %v234 = vpop.f32.mrb[0].mxu0
    %235 = vdwg.mxu0
    %vm236 = vcmask 130048
    %v237 = vsel %vm236, %v228, -inf
    %238 = vmax.xlane.f32.xlu0 %v237
    %v239 = vpop.xlane.xlu0 %238
    %v240 = vsel %vm236, %v233, -inf
    %241 = vmax.xlane.f32.xlu0 %v240
    %v242 = vpop.xlane.xlu0 %241
    %v243 = vsub.f32 %v228, %v239
    %v244 = vsub.f32 %v233, %v242
    %v245 = vmul.f32 %v243, 1.442695
    %v246 = vpow.pop %v245
    %v247 = vmul.f32 %v244, 1.442695
    %v248 = vpow.pop %v247
    %v249 = vsel %vm236, %v246, 0.0
    %250 = vadd.xlane.f32.xlu0 %v249
    %v251 = vpop.xlane.xlu0 %250
    %v252 = vsel %vm236, %v248, 0.0
    %253 = vadd.xlane.f32.xlu0 %v252
    %v254 = vpop.xlane.xlu0 %253
    %255 = vrot.lane.b32.xlu0 %v136, 64
    %v256 = vpop.permute.xlu0 %255
    %257 = vrot.lane.b32.xlu0 %v140, 64
    %v258 = vpop.permute.xlu0 %257
    %v262 = vsel %vm236, %v246, 0
    %v265 = vsel %vm236, %v248, 0
    %267 = vmatprep.subr.mxu0 0.0
    %268 = vmatpush1.msra.mxu0 %v256
    %269 = vmatprep.subr.mxu0 0.0
    %270 = vmatpush1.msra.mxu0 %v258
    %271 = vmatprep.subr.mxu0 0.0
    %272 = vmatpush1.msra.mxu0 0.0
    %273 = vmatprep.subr.mxu0 0.0
    %274 = vmatpush1.msra.mxu0 0.0
    %275 = vmatprep.subr.mxu0 0.0
    %276 = vmatpush1.msra.mxu0 0.0
    %277 = vmatprep.subr.mxu0 0.0
    %278 = vmatpush1.msra.mxu0 0.0
    %279 = vmatprep.subr.mxu0 0.0
    %280 = vmatpush1.msra.mxu0 0.0
    %281 = vmatprep.subr.mxu0 0.0
    %282 = vmatpush1.msra.mxu0 0.0
    %283 = vmatprep.subr.mxu0 0.0
    %284 = vmatpush1.msra.mxu0 0.0
    %285 = vmatprep.subr.mxu0 0.0
    %286 = vmatpush1.msra.mxu0 0.0
    %287 = vmatprep.subr.mxu0 0.0
    %288 = vmatpush1.msra.mxu0 0.0
    %289 = vmatprep.subr.mxu0 0.0
    %290 = vmatpush1.msra.mxu0 0.0
    %291 = vmatprep.subr.mxu0 0.0
    %292 = vmatpush1.msra.mxu0 0.0
    %293 = vmatprep.subr.mxu0 0.0
    %294 = vmatpush1.msra.mxu0 0.0
    %295 = vmatprep.subr.mxu0 0.0
    %296 = vmatpush1.msra.mxu0 0.0
    %297 = vmatprep.subr.mxu0 0.0
    %298 = vmatpush1.msra.mxu0 0.0
    %299 = vmatprep.subr.mxu0 0.0
    %300 = vmatpush1.msra.mxu0 0.0
    %301 = vmatprep.subr.mxu0 0.0
    %302 = vmatpush1.msra.mxu0 0.0
    %303 = vmatprep.subr.mxu0 0.0
    %304 = vmatpush1.msra.mxu0 0.0
    %305 = vmatprep.subr.mxu0 0.0
    %306 = vmatpush1.msra.mxu0 0.0
    %307 = vmatprep.subr.mxu0 0.0
    %308 = vmatpush1.msra.mxu0 0.0
    %309 = vmatprep.subr.mxu0 0.0
    %310 = vmatpush1.msra.mxu0 0.0
    %311 = vmatprep.subr.mxu0 0.0
    %312 = vmatpush1.msra.mxu0 0.0
    %313 = vmatprep.subr.mxu0 0.0
    %314 = vmatpush1.msra.mxu0 0.0
    %315 = vmatprep.subr.mxu0 0.0
    %316 = vmatpush1.msra.mxu0 0.0
    %317 = vmatprep.subr.mxu0 0.0
    %318 = vmatpush1.msra.mxu0 0.0
    %319 = vmatprep.subr.mxu0 0.0
    %320 = vmatpush1.msra.mxu0 0.0
    %321 = vmatprep.subr.mxu0 0.0
    %322 = vmatpush1.msra.mxu0 0.0
    %323 = vmatprep.subr.mxu0 0.0
    %324 = vmatpush1.msra.mxu0 0.0
    %325 = vmatprep.subr.mxu0 0.0
    %326 = vmatpush1.msra.mxu0 0.0
    %327 = vmatprep.subr.mxu0 0.0
    %328 = vmatpush1.msra.mxu0 0.0
    %329 = vmatprep.subr.mxu0 0.0
    %330 = vmatpush1.msra.mxu0 0.0
    %331 = vmatprep.mubr.f32.mxu0 0.0
    %332 = vmatmul.mubr.f32.gmra.mrb[0].mxu0 %v262
    %v333 = vpop.f32.mrb[0].mxu0
    %v334 = vadd.f32 0.0, %v333
    %v335 = vpop.f32.mrb[0].mxu0
    %336 = vmatprep.mubr.f32.mxu0 0.0
    %337 = vmatmul.mubr.f32.gmra.mrb[0].mxu0 %v265
    %v338 = vpop.f32.mrb[0].mxu0
    %v339 = vadd.f32 0.0, %v338
    %v340 = vpop.f32.mrb[0].mxu0
    %341 = vdwg.mxu0
    %v342 = vrcp.pop %v251
    %v343 = vrcp.pop %v254
    %v344 = vmul.f32 %v334, %v342
    %v345 = vmul.f32 %v339, %v343
    %v346 = vadd.f32 %v344, 0.0
    %v347 = vadd.f32 %v345, 0.0
    %348 = vrot.lane.b32.xlu0 %v136, 120
    %v349 = vpop.permute.xlu0 %348
    %350 = vrot.lane.b32.xlu0 %v140, 120
    %v351 = vpop.permute.xlu0 %350
    %352 = vrot.lane.b32.xlu0 %v136, 88
    %v353 = vpop.permute.xlu0 %352
    %354 = vrot.lane.b32.xlu0 %v140, 88
    %v355 = vpop.permute.xlu0 %354
    %v356 = vsel %vm152, %v349, 0
    %v358 = vsel %vm152, %v351, 0
    %v360 = vsel %vm152, %v353, 0
    %v362 = vsel %vm152, %v355, 0
    %364 = vmatprep.subr.mxu0 0.0
    %365 = vmatpush1.xpose.msra.mxu0 %v360
    %366 = vmatprep.subr.mxu0 0.0
    %367 = vmatpush1.xpose.msra.mxu0 %v362
    %368 = vmatprep.subr.mxu0 0.0
    %369 = vmatpush1.xpose.msra.mxu0 0.0
    %370 = vmatprep.subr.mxu0 0.0
    %371 = vmatpush1.xpose.msra.mxu0 0.0
    %372 = vmatprep.subr.mxu0 0.0
    %373 = vmatpush1.xpose.msra.mxu0 0.0
    %374 = vmatprep.subr.mxu0 0.0
    %375 = vmatpush1.xpose.msra.mxu0 0.0
    %376 = vmatprep.subr.mxu0 0.0
    %377 = vmatpush1.xpose.msra.mxu0 0.0
    %378 = vmatprep.subr.mxu0 0.0
    %379 = vmatpush1.xpose.msra.mxu0 0.0
    %380 = vmatprep.subr.mxu0 0.0
    %381 = vmatpush1.xpose.msra.mxu0 0.0
    %382 = vmatprep.subr.mxu0 0.0
    %383 = vmatpush1.xpose.msra.mxu0 0.0
    %384 = vmatprep.subr.mxu0 0.0
    %385 = vmatpush1.xpose.msra.mxu0 0.0
    %386 = vmatprep.subr.mxu0 0.0
    %387 = vmatpush1.xpose.msra.mxu0 0.0
    %388 = vmatprep.subr.mxu0 0.0
    %389 = vmatpush1.xpose.msra.mxu0 0.0
    %390 = vmatprep.subr.mxu0 0.0
    %391 = vmatpush1.xpose.msra.mxu0 0.0
    %392 = vmatprep.subr.mxu0 0.0
    %393 = vmatpush1.xpose.msra.mxu0 0.0
    %394 = vmatprep.subr.mxu0 0.0
    %395 = vmatpush1.xpose.msra.mxu0 0.0
    %396 = vmatprep.subr.mxu0 0.0
    %397 = vmatpush1.xpose.msra.mxu0 0.0
    %398 = vmatprep.subr.mxu0 0.0
    %399 = vmatpush1.xpose.msra.mxu0 0.0
    %400 = vmatprep.subr.mxu0 0.0
    %401 = vmatpush1.xpose.msra.mxu0 0.0
    %402 = vmatprep.subr.mxu0 0.0
    %403 = vmatpush1.xpose.msra.mxu0 0.0
    %404 = vmatprep.subr.mxu0 0.0
    %405 = vmatpush1.xpose.msra.mxu0 0.0
    %406 = vmatprep.subr.mxu0 0.0
    %407 = vmatpush1.xpose.msra.mxu0 0.0
    %408 = vmatprep.subr.mxu0 0.0
    %409 = vmatpush1.xpose.msra.mxu0 0.0
    %410 = vmatprep.subr.mxu0 0.0
    %411 = vmatpush1.xpose.msra.mxu0 0.0
    %412 = vmatprep.subr.mxu0 0.0
    %413 = vmatpush1.xpose.msra.mxu0 0.0
    %414 = vmatprep.subr.mxu0 0.0
    %415 = vmatpush1.xpose.msra.mxu0 0.0
    %416 = vmatprep.subr.mxu0 0.0
    %417 = vmatpush1.xpose.msra.mxu0 0.0
    %418 = vmatprep.subr.mxu0 0.0
    %419 = vmatpush1.xpose.msra.mxu0 0.0
    %420 = vmatprep.subr.mxu0 0.0
    %421 = vmatpush1.xpose.msra.mxu0 0.0
    %422 = vmatprep.subr.mxu0 0.0
    %423 = vmatpush1.xpose.msra.mxu0 0.0
    %424 = vmatprep.subr.mxu0 0.0
    %425 = vmatpush1.xpose.msra.mxu0 0.0
    %426 = vmatprep.subr.mxu0 0.0
    %427 = vmatpush1.xpose.msra.mxu0 0.0
    %428 = vmatprep.mubr.f32.mxu0 0.0
    %429 = vmatmul.mubr.f32.gmra.mrb[0].mxu0 %v356
    %v430 = vpop.f32.mrb[0].mxu0
    %v431 = vadd.f32 %v144, %v430
    %v432 = vpop.f32.mrb[0].mxu0
    %433 = vmatprep.mubr.f32.mxu0 0.0
    %434 = vmatmul.mubr.f32.gmra.mrb[0].mxu0 %v358
    %v435 = vpop.f32.mrb[0].mxu0
    %v436 = vadd.f32 %v145, %v435
    %v437 = vpop.f32.mrb[0].mxu0
    %438 = vdwg.mxu0
    %v439 = vsel %vm236, %v431, -inf
    %440 = vmax.xlane.f32.xlu0 %v439
    %v441 = vpop.xlane.xlu0 %440
    %v442 = vsel %vm236, %v436, -inf
    %443 = vmax.xlane.f32.xlu0 %v442
    %v444 = vpop.xlane.xlu0 %443
    %v445 = vsub.f32 %v431, %v441
    %v446 = vsub.f32 %v436, %v444
    %v447 = vmul.f32 %v445, 1.442695
    %v448 = vpow.pop %v447
    %v449 = vmul.f32 %v446, 1.442695
    %v450 = vpow.pop %v449
    %v451 = vsel %vm236, %v448, 0.0
    %452 = vadd.xlane.f32.xlu0 %v451
    %v453 = vpop.xlane.xlu0 %452
    %v454 = vsel %vm236, %v450, 0.0
    %455 = vadd.xlane.f32.xlu0 %v454
    %v456 = vpop.xlane.xlu0 %455
    %457 = vrot.lane.b32.xlu0 %v136, 32
    %v458 = vpop.permute.xlu0 %457
    %459 = vrot.lane.b32.xlu0 %v140, 32
    %v460 = vpop.permute.xlu0 %459
    %v464 = vsel %vm236, %v448, 0
    %v467 = vsel %vm236, %v450, 0
    %469 = vmatprep.subr.mxu0 0.0
    %470 = vmatpush1.msra.mxu0 %v458
    %471 = vmatprep.subr.mxu0 0.0
    %472 = vmatpush1.msra.mxu0 %v460
    %473 = vmatprep.subr.mxu0 0.0
    %474 = vmatpush1.msra.mxu0 0.0
    %475 = vmatprep.subr.mxu0 0.0
    %476 = vmatpush1.msra.mxu0 0.0
    %477 = vmatprep.subr.mxu0 0.0
    %478 = vmatpush1.msra.mxu0 0.0
    %479 = vmatprep.subr.mxu0 0.0
    %480 = vmatpush1.msra.mxu0 0.0
    %481 = vmatprep.subr.mxu0 0.0
    %482 = vmatpush1.msra.mxu0 0.0
    %483 = vmatprep.subr.mxu0 0.0
    %484 = vmatpush1.msra.mxu0 0.0
    %485 = vmatprep.subr.mxu0 0.0
    %486 = vmatpush1.msra.mxu0 0.0
    %487 = vmatprep.subr.mxu0 0.0
    %488 = vmatpush1.msra.mxu0 0.0
    %489 = vmatprep.subr.mxu0 0.0
    %490 = vmatpush1.msra.mxu0 0.0
    %491 = vmatprep.subr.mxu0 0.0
    %492 = vmatpush1.msra.mxu0 0.0
    %493 = vmatprep.subr.mxu0 0.0
    %494 = vmatpush1.msra.mxu0 0.0
    %495 = vmatprep.subr.mxu0 0.0
    %496 = vmatpush1.msra.mxu0 0.0
    %497 = vmatprep.subr.mxu0 0.0
    %498 = vmatpush1.msra.mxu0 0.0
    %499 = vmatprep.subr.mxu0 0.0
    %500 = vmatpush1.msra.mxu0 0.0
    %501 = vmatprep.subr.mxu0 0.0
    %502 = vmatpush1.msra.mxu0 0.0
    %503 = vmatprep.subr.mxu0 0.0
    %504 = vmatpush1.msra.mxu0 0.0
    %505 = vmatprep.subr.mxu0 0.0
    %506 = vmatpush1.msra.mxu0 0.0
    %507 = vmatprep.subr.mxu0 0.0
    %508 = vmatpush1.msra.mxu0 0.0
    %509 = vmatprep.subr.mxu0 0.0
    %510 = vmatpush1.msra.mxu0 0.0
    %511 = vmatprep.subr.mxu0 0.0
    %512 = vmatpush1.msra.mxu0 0.0
    %513 = vmatprep.subr.mxu0 0.0
    %514 = vmatpush1.msra.mxu0 0.0
    %515 = vmatprep.subr.mxu0 0.0
    %516 = vmatpush1.msra.mxu0 0.0
    %517 = vmatprep.subr.mxu0 0.0
    %518 = vmatpush1.msra.mxu0 0.0
    %519 = vmatprep.subr.mxu0 0.0
    %520 = vmatpush1.msra.mxu0 0.0
    %521 = vmatprep.subr.mxu0 0.0
    %522 = vmatpush1.msra.mxu0 0.0
    %523 = vmatprep.subr.mxu0 0.0
    %524 = vmatpush1.msra.mxu0 0.0
    %525 = vmatprep.subr.mxu0 0.0
    %526 = vmatpush1.msra.mxu0 0.0
    %527 = vmatprep.subr.mxu0 0.0
    %528 = vmatpush1.msra.mxu0 0.0
    %529 = vmatprep.subr.mxu0 0.0
    %530 = vmatpush1.msra.mxu0 0.0
    %531 = vmatprep.subr.mxu0 0.0
    %532 = vmatpush1.msra.mxu0 0.0
    %533 = vmatprep.mubr.f32.mxu0 0.0
    %534 = vmatmul.mubr.f32.gmra.mrb[0].mxu0 %v464
    %v535 = vpop.f32.mrb[0].mxu0
    %v536 = vadd.f32 0.0, %v535
    %v537 = vpop.f32.mrb[0].mxu0
    %538 = vmatprep.mubr.f32.mxu0 0.0
    %539 = vmatmul.mubr.f32.gmra.mrb[0].mxu0 %v467
    %v540 = vpop.f32.mrb[0].mxu0
    %v541 = vadd.f32 0.0, %v540
    %v542 = vpop.f32.mrb[0].mxu0
    %543 = vdwg.mxu0
    %v544 = vrcp.pop %v453
    %v545 = vrcp.pop %v456
    %v546 = vmul.f32 %v536, %v544
    %v547 = vmul.f32 %v541, %v545
    %v548 = vadd.f32 %v346, %v546
    %v549 = vadd.f32 %v347, %v547
    %550 = vrot.lane.b32.xlu0 %v136, 112
    %v551 = vpop.permute.xlu0 %550
    %552 = vrot.lane.b32.xlu0 %v140, 112
    %v553 = vpop.permute.xlu0 %552
    %554 = vrot.lane.b32.xlu0 %v136, 80
    %v555 = vpop.permute.xlu0 %554
    %556 = vrot.lane.b32.xlu0 %v140, 80
    %v557 = vpop.permute.xlu0 %556
    %v558 = vsel %vm152, %v551, 0
    %v560 = vsel %vm152, %v553, 0
    %v562 = vsel %vm152, %v555, 0
    %v564 = vsel %vm152, %v557, 0
    %566 = vmatprep.subr.mxu0 0.0
    %567 = vmatpush1.xpose.msra.mxu0 %v562
    %568 = vmatprep.subr.mxu0 0.0
    %569 = vmatpush1.xpose.msra.mxu0 %v564
    %570 = vmatprep.subr.mxu0 0.0
    %571 = vmatpush1.xpose.msra.mxu0 0.0
    %572 = vmatprep.subr.mxu0 0.0
    %573 = vmatpush1.xpose.msra.mxu0 0.0
    %574 = vmatprep.subr.mxu0 0.0
    %575 = vmatpush1.xpose.msra.mxu0 0.0
    %576 = vmatprep.subr.mxu0 0.0
    %577 = vmatpush1.xpose.msra.mxu0 0.0
    %578 = vmatprep.subr.mxu0 0.0
    %579 = vmatpush1.xpose.msra.mxu0 0.0
    %580 = vmatprep.subr.mxu0 0.0
    %581 = vmatpush1.xpose.msra.mxu0 0.0
    %582 = vmatprep.subr.mxu0 0.0
    %583 = vmatpush1.xpose.msra.mxu0 0.0
    %584 = vmatprep.subr.mxu0 0.0
    %585 = vmatpush1.xpose.msra.mxu0 0.0
    %586 = vmatprep.subr.mxu0 0.0
    %587 = vmatpush1.xpose.msra.mxu0 0.0
    %588 = vmatprep.subr.mxu0 0.0
    %589 = vmatpush1.xpose.msra.mxu0 0.0
    %590 = vmatprep.subr.mxu0 0.0
    %591 = vmatpush1.xpose.msra.mxu0 0.0
    %592 = vmatprep.subr.mxu0 0.0
    %593 = vmatpush1.xpose.msra.mxu0 0.0
    %594 = vmatprep.subr.mxu0 0.0
    %595 = vmatpush1.xpose.msra.mxu0 0.0
    %596 = vmatprep.subr.mxu0 0.0
    %597 = vmatpush1.xpose.msra.mxu0 0.0
    %598 = vmatprep.subr.mxu0 0.0
    %599 = vmatpush1.xpose.msra.mxu0 0.0
    %600 = vmatprep.subr.mxu0 0.0
    %601 = vmatpush1.xpose.msra.mxu0 0.0
    %602 = vmatprep.subr.mxu0 0.0
    %603 = vmatpush1.xpose.msra.mxu0 0.0
    %604 = vmatprep.subr.mxu0 0.0
    %605 = vmatpush1.xpose.msra.mxu0 0.0
    %606 = vmatprep.subr.mxu0 0.0
    %607 = vmatpush1.xpose.msra.mxu0 0.0
    %608 = vmatprep.subr.mxu0 0.0
    %609 = vmatpush1.xpose.msra.mxu0 0.0
    %610 = vmatprep.subr.mxu0 0.0
    %611 = vmatpush1.xpose.msra.mxu0 0.0
    %612 = vmatprep.subr.mxu0 0.0
    %613 = vmatpush1.xpose.msra.mxu0 0.0
    %614 = vmatprep.subr.mxu0 0.0
    %615 = vmatpush1.xpose.msra.mxu0 0.0
    %616 = vmatprep.subr.mxu0 0.0
    %617 = vmatpush1.xpose.msra.mxu0 0.0
    %618 = vmatprep.subr.mxu0 0.0
    %619 = vmatpush1.xpose.msra.mxu0 0.0
    %620 = vmatprep.subr.mxu0 0.0
    %621 = vmatpush1.xpose.msra.mxu0 0.0
    %622 = vmatprep.subr.mxu0 0.0
    %623 = vmatpush1.xpose.msra.mxu0 0.0
    %624 = vmatprep.subr.mxu0 0.0
    %625 = vmatpush1.xpose.msra.mxu0 0.0
    %626 = vmatprep.subr.mxu0 0.0
    %627 = vmatpush1.xpose.msra.mxu0 0.0
    %628 = vmatprep.subr.mxu0 0.0
    %629 = vmatpush1.xpose.msra.mxu0 0.0
    %630 = vmatprep.mubr.f32.mxu0 0.0
    %631 = vmatmul.mubr.f32.gmra.mrb[0].mxu0 %v558
    %v632 = vpop.f32.mrb[0].mxu0
    %v633 = vadd.f32 %v144, %v632
    %v634 = vpop.f32.mrb[0].mxu0
    %635 = vmatprep.mubr.f32.mxu0 0.0
    %636 = vmatmul.mubr.f32.gmra.mrb[0].mxu0 %v560
    %v637 = vpop.f32.mrb[0].mxu0
    %v638 = vadd.f32 %v145, %v637
    %v639 = vpop.f32.mrb[0].mxu0
    %640 = vdwg.mxu0
    %v641 = vsel %vm236, %v633, -inf
    %642 = vmax.xlane.f32.xlu0 %v641
    %v643 = vpop.xlane.xlu0 %642
    %v644 = vsel %vm236, %v638, -inf
    %645 = vmax.xlane.f32.xlu0 %v644
    %v646 = vpop.xlane.xlu0 %645
    %v647 = vsub.f32 %v633, %v643
    %v648 = vsub.f32 %v638, %v646
    %v649 = vmul.f32 %v647, 1.442695
    %v650 = vpow.pop %v649
    %v651 = vmul.f32 %v648, 1.442695
    %v652 = vpow.pop %v651
    %v653 = vsel %vm236, %v650, 0.0
    %654 = vadd.xlane.f32.xlu0 %v653
    %v655 = vpop.xlane.xlu0 %654
    %v656 = vsel %vm236, %v652, 0.0
    %657 = vadd.xlane.f32.xlu0 %v656
    %v658 = vpop.xlane.xlu0 %657
    %v660 = vsel %vm236, %v650, 0
    %v663 = vsel %vm236, %v652, 0
    %665 = vmatprep.subr.mxu0 0.0
    %666 = vmatpush1.msra.mxu0 %v138
    %667 = vmatprep.subr.mxu0 0.0
    %668 = vmatpush1.msra.mxu0 %v142
    %669 = vmatprep.subr.mxu0 0.0
    %670 = vmatpush1.msra.mxu0 0.0
    %671 = vmatprep.subr.mxu0 0.0
    %672 = vmatpush1.msra.mxu0 0.0
    %673 = vmatprep.subr.mxu0 0.0
    %674 = vmatpush1.msra.mxu0 0.0
    %675 = vmatprep.subr.mxu0 0.0
    %676 = vmatpush1.msra.mxu0 0.0
    %677 = vmatprep.subr.mxu0 0.0
    %678 = vmatpush1.msra.mxu0 0.0
    %679 = vmatprep.subr.mxu0 0.0
    %680 = vmatpush1.msra.mxu0 0.0
    %681 = vmatprep.subr.mxu0 0.0
    %682 = vmatpush1.msra.mxu0 0.0
    %683 = vmatprep.subr.mxu0 0.0
    %684 = vmatpush1.msra.mxu0 0.0
    %685 = vmatprep.subr.mxu0 0.0
    %686 = vmatpush1.msra.mxu0 0.0
    %687 = vmatprep.subr.mxu0 0.0
    %688 = vmatpush1.msra.mxu0 0.0
    %689 = vmatprep.subr.mxu0 0.0
    %690 = vmatpush1.msra.mxu0 0.0
    %691 = vmatprep.subr.mxu0 0.0
    %692 = vmatpush1.msra.mxu0 0.0
    %693 = vmatprep.subr.mxu0 0.0
    %694 = vmatpush1.msra.mxu0 0.0
    %695 = vmatprep.subr.mxu0 0.0
    %696 = vmatpush1.msra.mxu0 0.0
    %697 = vmatprep.subr.mxu0 0.0
    %698 = vmatpush1.msra.mxu0 0.0
    %699 = vmatprep.subr.mxu0 0.0
    %700 = vmatpush1.msra.mxu0 0.0
    %701 = vmatprep.subr.mxu0 0.0
    %702 = vmatpush1.msra.mxu0 0.0
    %703 = vmatprep.subr.mxu0 0.0
    %704 = vmatpush1.msra.mxu0 0.0
    %705 = vmatprep.subr.mxu0 0.0
    %706 = vmatpush1.msra.mxu0 0.0
    %707 = vmatprep.subr.mxu0 0.0
    %708 = vmatpush1.msra.mxu0 0.0
    %709 = vmatprep.subr.mxu0 0.0
    %710 = vmatpush1.msra.mxu0 0.0
    %711 = vmatprep.subr.mxu0 0.0
    %712 = vmatpush1.msra.mxu0 0.0
    %713 = vmatprep.subr.mxu0 0.0
    %714 = vmatpush1.msra.mxu0 0.0
    %715 = vmatprep.subr.mxu0 0.0
    %716 = vmatpush1.msra.mxu0 0.0
    %717 = vmatprep.subr.mxu0 0.0
    %718 = vmatpush1.msra.mxu0 0.0
    %719 = vmatprep.subr.mxu0 0.0
    %720 = vmatpush1.msra.mxu0 0.0
    %721 = vmatprep.subr.mxu0 0.0
    %722 = vmatpush1.msra.mxu0 0.0
    %723 = vmatprep.subr.mxu0 0.0
    %724 = vmatpush1.msra.mxu0 0.0
    %725 = vmatprep.subr.mxu0 0.0
    %726 = vmatpush1.msra.mxu0 0.0
    %727 = vmatprep.subr.mxu0 0.0
    %728 = vmatpush1.msra.mxu0 0.0
    %729 = vmatprep.mubr.f32.mxu0 0.0
    %730 = vmatmul.mubr.f32.gmra.mrb[0].mxu0 %v660
    %v731 = vpop.f32.mrb[0].mxu0
    %v732 = vadd.f32 0.0, %v731
    %v733 = vpop.f32.mrb[0].mxu0
    %734 = vmatprep.mubr.f32.mxu0 0.0
    %735 = vmatmul.mubr.f32.gmra.mrb[0].mxu0 %v663
    %v736 = vpop.f32.mrb[0].mxu0
    %v737 = vadd.f32 0.0, %v736
    %v738 = vpop.f32.mrb[0].mxu0
    %739 = vdwg.mxu0
    %v740 = vrcp.pop %v655
    %v741 = vrcp.pop %v658
    %v742 = vmul.f32 %v732, %v740
    %v743 = vmul.f32 %v737, %v741
    %v744 = vadd.f32 %v548, %v742
    %v745 = vadd.f32 %v549, %v743
    %746 = vrot.lane.b32.xlu0 %v136, 104
    %v747 = vpop.permute.xlu0 %746
    %748 = vrot.lane.b32.xlu0 %v140, 104
    %v749 = vpop.permute.xlu0 %748
    %750 = vrot.lane.b32.xlu0 %v136, 72
    %v751 = vpop.permute.xlu0 %750
    %752 = vrot.lane.b32.xlu0 %v140, 72
    %v753 = vpop.permute.xlu0 %752
    %v754 = vsel %vm152, %v747, 0
    %v756 = vsel %vm152, %v749, 0
    %v758 = vsel %vm152, %v751, 0
    %v760 = vsel %vm152, %v753, 0
    %762 = vmatprep.subr.mxu0 0.0
    %763 = vmatpush1.xpose.msra.mxu0 %v758
    %764 = vmatprep.subr.mxu0 0.0
    %765 = vmatpush1.xpose.msra.mxu0 %v760
    %766 = vmatprep.subr.mxu0 0.0
    %767 = vmatpush1.xpose.msra.mxu0 0.0
    %768 = vmatprep.subr.mxu0 0.0
    %769 = vmatpush1.xpose.msra.mxu0 0.0
    %770 = vmatprep.subr.mxu0 0.0
    %771 = vmatpush1.xpose.msra.mxu0 0.0
    %772 = vmatprep.subr.mxu0 0.0
    %773 = vmatpush1.xpose.msra.mxu0 0.0
    %774 = vmatprep.subr.mxu0 0.0
    %775 = vmatpush1.xpose.msra.mxu0 0.0
    %776 = vmatprep.subr.mxu0 0.0
    %777 = vmatpush1.xpose.msra.mxu0 0.0
    %778 = vmatprep.subr.mxu0 0.0
    %779 = vmatpush1.xpose.msra.mxu0 0.0
    %780 = vmatprep.subr.mxu0 0.0
    %781 = vmatpush1.xpose.msra.mxu0 0.0
    %782 = vmatprep.subr.mxu0 0.0
    %783 = vmatpush1.xpose.msra.mxu0 0.0
    %784 = vmatprep.subr.mxu0 0.0
    %785 = vmatpush1.xpose.msra.mxu0 0.0
    %786 = vmatprep.subr.mxu0 0.0
    %787 = vmatpush1.xpose.msra.mxu0 0.0
    %788 = vmatprep.subr.mxu0 0.0
    %789 = vmatpush1.xpose.msra.mxu0 0.0
    %790 = vmatprep.subr.mxu0 0.0
    %791 = vmatpush1.xpose.msra.mxu0 0.0
    %792 = vmatprep.subr.mxu0 0.0
    %793 = vmatpush1.xpose.msra.mxu0 0.0
    %794 = vmatprep.subr.mxu0 0.0
    %795 = vmatpush1.xpose.msra.mxu0 0.0
    %796 = vmatprep.subr.mxu0 0.0
    %797 = vmatpush1.xpose.msra.mxu0 0.0
    %798 = vmatprep.subr.mxu0 0.0
    %799 = vmatpush1.xpose.msra.mxu0 0.0
    %800 = vmatprep.subr.mxu0 0.0
    %801 = vmatpush1.xpose.msra.mxu0 0.0
    %802 = vmatprep.subr.mxu0 0.0
    %803 = vmatpush1.xpose.msra.mxu0 0.0
    %804 = vmatprep.subr.mxu0 0.0
    %805 = vmatpush1.xpose.msra.mxu0 0.0
    %806 = vmatprep.subr.mxu0 0.0
    %807 = vmatpush1.xpose.msra.mxu0 0.0
    %808 = vmatprep.subr.mxu0 0.0
    %809 = vmatpush1.xpose.msra.mxu0 0.0
    %810 = vmatprep.subr.mxu0 0.0
    %811 = vmatpush1.xpose.msra.mxu0 0.0
    %812 = vmatprep.subr.mxu0 0.0
    %813 = vmatpush1.xpose.msra.mxu0 0.0
    %814 = vmatprep.subr.mxu0 0.0
    %815 = vmatpush1.xpose.msra.mxu0 0.0
    %816 = vmatprep.subr.mxu0 0.0
    %817 = vmatpush1.xpose.msra.mxu0 0.0
    %818 = vmatprep.subr.mxu0 0.0
    %819 = vmatpush1.xpose.msra.mxu0 0.0
    %820 = vmatprep.subr.mxu0 0.0
    %821 = vmatpush1.xpose.msra.mxu0 0.0
    %822 = vmatprep.subr.mxu0 0.0
    %823 = vmatpush1.xpose.msra.mxu0 0.0
    %824 = vmatprep.subr.mxu0 0.0
    %825 = vmatpush1.xpose.msra.mxu0 0.0
    %826 = vmatprep.mubr.f32.mxu0 0.0
    %827 = vmatmul.mubr.f32.gmra.mrb[0].mxu0 %v754
    %v828 = vpop.f32.mrb[0].mxu0
    %v829 = vadd.f32 %v144, %v828
    %v830 = vpop.f32.mrb[0].mxu0
    %831 = vmatprep.mubr.f32.mxu0 0.0
    %832 = vmatmul.mubr.f32.gmra.mrb[0].mxu0 %v756
    %v833 = vpop.f32.mrb[0].mxu0
    %v834 = vadd.f32 %v145, %v833
    %v835 = vpop.f32.mrb[0].mxu0
    %836 = vdwg.mxu0
    %v837 = vsel %vm236, %v829, -inf
    %838 = vmax.xlane.f32.xlu0 %v837
    %v839 = vpop.xlane.xlu0 %838
    %v840 = vsel %vm236, %v834, -inf
    %841 = vmax.xlane.f32.xlu0 %v840
    %v842 = vpop.xlane.xlu0 %841
    %v843 = vsub.f32 %v829, %v839
    %v844 = vsub.f32 %v834, %v842
    %v845 = vmul.f32 %v843, 1.442695
    %v846 = vpow.pop %v845
    %v847 = vmul.f32 %v844, 1.442695
    %v848 = vpow.pop %v847
    %v849 = vsel %vm236, %v846, 0.0
    %850 = vadd.xlane.f32.xlu0 %v849
    %v851 = vpop.xlane.xlu0 %850
    %v852 = vsel %vm236, %v848, 0.0
    %853 = vadd.xlane.f32.xlu0 %v852
    %v854 = vpop.xlane.xlu0 %853
    %857 = vrot.lane.b32.xlu0 %v138, 96
    %v858 = vpop.permute.xlu0 %857
    %859 = vrot.lane.b32.xlu0 %v142, 96
    %v860 = vpop.permute.xlu0 %859
    %v864 = vsel %vm236, %v846, 0
    %v867 = vsel %vm236, %v848, 0
    %869 = vmatprep.subr.mxu0 0.0
    %870 = vmatpush1.msra.mxu0 %v858
    %871 = vmatprep.subr.mxu0 0.0
    %872 = vmatpush1.msra.mxu0 %v860
    %873 = vmatprep.subr.mxu0 0.0
    %874 = vmatpush1.msra.mxu0 0.0
    %875 = vmatprep.subr.mxu0 0.0
    %876 = vmatpush1.msra.mxu0 0.0
    %877 = vmatprep.subr.mxu0 0.0
    %878 = vmatpush1.msra.mxu0 0.0
    %879 = vmatprep.subr.mxu0 0.0
    %880 = vmatpush1.msra.mxu0 0.0
    %881 = vmatprep.subr.mxu0 0.0
    %882 = vmatpush1.msra.mxu0 0.0
    %883 = vmatprep.subr.mxu0 0.0
    %884 = vmatpush1.msra.mxu0 0.0
    %885 = vmatprep.subr.mxu0 0.0
    %886 = vmatpush1.msra.mxu0 0.0
    %887 = vmatprep.subr.mxu0 0.0
    %888 = vmatpush1.msra.mxu0 0.0
    %889 = vmatprep.subr.mxu0 0.0
    %890 = vmatpush1.msra.mxu0 0.0
    %891 = vmatprep.subr.mxu0 0.0
    %892 = vmatpush1.msra.mxu0 0.0
    %893 = vmatprep.subr.mxu0 0.0
    %894 = vmatpush1.msra.mxu0 0.0
    %895 = vmatprep.subr.mxu0 0.0
    %896 = vmatpush1.msra.mxu0 0.0
    %897 = vmatprep.subr.mxu0 0.0
    %898 = vmatpush1.msra.mxu0 0.0
    %899 = vmatprep.subr.mxu0 0.0
    %900 = vmatpush1.msra.mxu0 0.0
    %901 = vmatprep.subr.mxu0 0.0
    %902 = vmatpush1.msra.mxu0 0.0
    %903 = vmatprep.subr.mxu0 0.0
    %904 = vmatpush1.msra.mxu0 0.0
    %905 = vmatprep.subr.mxu0 0.0
    %906 = vmatpush1.msra.mxu0 0.0
    %907 = vmatprep.subr.mxu0 0.0
    %908 = vmatpush1.msra.mxu0 0.0
    %909 = vmatprep.subr.mxu0 0.0
    %910 = vmatpush1.msra.mxu0 0.0
    %911 = vmatprep.subr.mxu0 0.0
    %912 = vmatpush1.msra.mxu0 0.0
    %913 = vmatprep.subr.mxu0 0.0
    %914 = vmatpush1.msra.mxu0 0.0
    %915 = vmatprep.subr.mxu0 0.0
    %916 = vmatpush1.msra.mxu0 0.0
    %917 = vmatprep.subr.mxu0 0.0
    %918 = vmatpush1.msra.mxu0 0.0
    %919 = vmatprep.subr.mxu0 0.0
    %920 = vmatpush1.msra.mxu0 0.0
    %921 = vmatprep.subr.mxu0 0.0
    %922 = vmatpush1.msra.mxu0 0.0
    %923 = vmatprep.subr.mxu0 0.0
    %924 = vmatpush1.msra.mxu0 0.0
    %925 = vmatprep.subr.mxu0 0.0
    %926 = vmatpush1.msra.mxu0 0.0
    %927 = vmatprep.subr.mxu0 0.0
    %928 = vmatpush1.msra.mxu0 0.0
    %929 = vmatprep.subr.mxu0 0.0
    %930 = vmatpush1.msra.mxu0 0.0
    %931 = vmatprep.subr.mxu0 0.0
    %932 = vmatpush1.msra.mxu0 0.0
    %933 = vmatprep.mubr.f32.mxu0 0.0
    %934 = vmatmul.mubr.f32.gmra.mrb[0].mxu0 %v864
    %v935 = vpop.f32.mrb[0].mxu0
    %v936 = vadd.f32 0.0, %v935
    %v937 = vpop.f32.mrb[0].mxu0
    %938 = vmatprep.mubr.f32.mxu0 0.0
    %939 = vmatmul.mubr.f32.gmra.mrb[0].mxu0 %v867
    %v940 = vpop.f32.mrb[0].mxu0
    %v941 = vadd.f32 0.0, %v940
    %v942 = vpop.f32.mrb[0].mxu0
    %943 = vdwg.mxu0
    %v944 = vrcp.pop %v851
    %v945 = vrcp.pop %v854
    %v946 = vmul.f32 %v936, %v944
    %v947 = vmul.f32 %v941, %v945
    %v948 = vadd.f32 %v744, %v946
    %v949 = vadd.f32 %v745, %v947
    %v950 = vadd.f32 %v57, %v948
    %v951 = vadd.f32 %v58, %v949
    %v952 = vsel %vm97, %v950, 0.0
    %953 = vadd.xlane.f32.xlu0 %v952
    %v954 = vpop.xlane.xlu0 %953
    %v955 = vsel %vm97, %v951, 0.0
    %956 = vadd.xlane.f32.xlu0 %v955
    %v957 = vpop.xlane.xlu0 %956
    %v958 = vrcp.pop 32.0
    %v959 = vmul.f32 %v954, %v958
    %v960 = vmul.f32 %v957, %v958
    %v961 = vsub.f32 %v950, %v959
    %v962 = vsub.f32 %v951, %v960
    %v963 = vmul.f32 %v961, %v961
    %v964 = vmul.f32 %v962, %v962
    %v965 = vsel %vm97, %v963, 0.0
    %966 = vadd.xlane.f32.xlu0 %v965
    %v967 = vpop.xlane.xlu0 %966
    %v968 = vsel %vm97, %v964, 0.0
    %969 = vadd.xlane.f32.xlu0 %v968
    %v970 = vpop.xlane.xlu0 %969
    %v971 = vmul.f32 %v967, %v958
    %v972 = vmul.f32 %v970, %v958
    %v973 = vld [vmem:[#allocation7 + $0x22] ss:$0 sm:$0xff]
    %v974 = vadd.f32 %v971, 1e-05
    %v975 = vadd.f32 %v972, 1e-05
    %v976 = vrsqrt.pop %v974
    %v977 = vrsqrt.pop %v975
    %v978 = vmul.f32 %v961, %v976
    %v979 = vmul.f32 %v962, %v977
    %v980 = vmul.f32 %v978, %v973
    %v981 = vmul.f32 %v979, %v973
    %983 = vrot.lane.b32.xlu0 %v973, 96
    %v984 = vpop.permute.xlu0 %983
    %v986 = vadd.f32 %v980, %v984
    %v987 = vadd.f32 %v981, %v984
    %v988 = vld [vmem:[#allocation5 + $0x20] sm:$0xf]
    %v989 = vld [vmem:[#allocation5 + $0x28] sm:$0xf]
    %v990 = vld [vmem:[#allocation5 + $0x30] sm:$0xf]
    %v991 = vld [vmem:[#allocation5 + $0x38] sm:$0xf]
    %v992 = vld [vmem:[#allocation5 + $0x4] sm:$0xf]
    %v993 = vld [vmem:[#allocation5 + $0xc] sm:$0xf]
    %v994 = vld [vmem:[#allocation5 + $0x14] sm:$0xf]
    %v995 = vld [vmem:[#allocation5 + $0x1c] sm:$0xf]
    %v996 = vld [vmem:[#allocation5 + $0x24] sm:$0xf]
    %v997 = vld [vmem:[#allocation5 + $0x2c] sm:$0xf]
    %v998 = vld [vmem:[#allocation5 + $0x34] sm:$0xf]
    %v999 = vld [vmem:[#allocation5 + $0x3c] sm:$0xf]
    %v1000 = vld [vmem:[#allocation7 + $0x21] ss:$0 sm:$0xff]
    %v1001 = vpack.c.bf16 %v987, %v986
    %v1006 = vunpack.c.l.b16 %v988
    %v1007 = vunpack.c.l.b16 %v989
    %v1008 = vunpack.c.l.b16 %v990
    %v1009 = vunpack.c.l.b16 %v991
    %v1010 = vpack.c.b16 %v1007, %v1006
    %v1011 = vpack.c.b16 %v1009, %v1008
    %v1015 = vsel %vm97, %v1001, 0
    %1017 = vmatprep.subr.bf16.mxu0 0
    %1018 = vmatpush1.bf16.msra.mxu0 %v1010
    %1019 = vmatprep.subr.bf16.mxu0 0
    %1020 = vmatpush1.bf16.msra.mxu0 %v1011
    %1021 = vmatprep.subr.bf16.mxu0 0
    %1022 = vmatpush1.bf16.msra.mxu0 0
    %1023 = vmatprep.subr.bf16.mxu0 0
    %1024 = vmatpush1.bf16.msra.mxu0 0
    %1025 = vmatprep.subr.bf16.mxu0 0
    %1026 = vmatpush1.bf16.msra.mxu0 0
    %1027 = vmatprep.subr.bf16.mxu0 0
    %1028 = vmatpush1.bf16.msra.mxu0 0
    %1029 = vmatprep.subr.bf16.mxu0 0
    %1030 = vmatpush1.bf16.msra.mxu0 0
    %1031 = vmatprep.subr.bf16.mxu0 0
    %1032 = vmatpush1.bf16.msra.mxu0 0
    %1033 = vmatprep.subr.bf16.mxu0 0
    %1034 = vmatpush1.bf16.msra.mxu0 0
    %1035 = vmatprep.subr.bf16.mxu0 0
    %1036 = vmatpush1.bf16.msra.mxu0 0
    %1037 = vmatprep.subr.bf16.mxu0 0
    %1038 = vmatpush1.bf16.msra.mxu0 0
    %1039 = vmatprep.subr.bf16.mxu0 0
    %1040 = vmatpush1.bf16.msra.mxu0 0
    %1041 = vmatprep.subr.bf16.mxu0 0
    %1042 = vmatpush1.bf16.msra.mxu0 0
    %1043 = vmatprep.subr.bf16.mxu0 0
    %1044 = vmatpush1.bf16.msra.mxu0 0
    %1045 = vmatprep.subr.bf16.mxu0 0
    %1046 = vmatpush1.bf16.msra.mxu0 0
    %1047 = vmatprep.subr.bf16.mxu0 0
    %1048 = vmatpush1.bf16.msra.mxu0 0
    %1049 = vmatprep.mubr.bf16.mxu0 0
    %1050 = vmatmul.mubr.bf16.gmra.mrb[0].mxu0 %v1015
    %v1051 = vpop.f32.mrb[0].mxu0
    %v1052 = vadd.f32 %v1000, %v1051
    %v1053 = vpop.f32.mrb[0].mxu0
    %v1054 = vpop.f32.mrb[0].mxu0
    %v1055 = vadd.f32 %v1000, %v1054
    %v1056 = vpop.f32.mrb[0].mxu0
    %1057 = vdwg.mxu0
    %v1058 = vmax.f32 %v1052, 0.0
    %v1059 = vmax.f32 %v1055, 0.0
    %v1060 = vpack.c.bf16 %v1059, %v1058
    %v1069 = vunpack.c.l.b16 %v992
    %v1070 = vunpack.c.l.b16 %v993
    %v1071 = vunpack.c.l.b16 %v994
    %v1072 = vunpack.c.l.b16 %v995
    %v1073 = vunpack.c.l.b16 %v996
    %v1074 = vunpack.c.l.b16 %v997
    %v1075 = vunpack.c.l.b16 %v998
    %v1076 = vunpack.c.l.b16 %v999
    %v1077 = vpack.c.b16 %v1070, %v1069
    %v1078 = vpack.c.b16 %v1072, %v1071
    %v1079 = vpack.c.b16 %v1074, %v1073
    %v1080 = vpack.c.b16 %v1076, %v1075
    %1081 = vrot.lane.b32.xlu0 %v1077, 64
    %v1082 = vpop.permute.xlu0 %1081
    %1083 = vrot.lane.b32.xlu0 %v1078, 64
    %v1084 = vpop.permute.xlu0 %1083
    %1085 = vrot.lane.b32.xlu0 %v1079, 64
    %v1086 = vpop.permute.xlu0 %1085
    %1087 = vrot.lane.b32.xlu0 %v1080, 64
    %v1088 = vpop.permute.xlu0 %1087
    %1094 = vrot.lane.b32.xlu0 %v1000, 64
    %v1095 = vpop.permute.xlu0 %1094
    %vm1097 = vcmask 523264
    %v1099 = vsel %vm1097, %v1060, 0
    %1101 = vmatprep.subr.bf16.mxu0 0
    %1102 = vmatpush1.bf16.msra.mxu0 %v1082
    %1103 = vmatprep.subr.bf16.mxu0 0
    %1104 = vmatpush1.bf16.msra.mxu0 %v1084
    %1105 = vmatprep.subr.bf16.mxu0 0
    %1106 = vmatpush1.bf16.msra.mxu0 %v1086
    %1107 = vmatprep.subr.bf16.mxu0 0
    %1108 = vmatpush1.bf16.msra.mxu0 %v1088
    %1109 = vmatprep.subr.bf16.mxu0 0
    %1110 = vmatpush1.bf16.msra.mxu0 0
    %1111 = vmatprep.subr.bf16.mxu0 0
    %1112 = vmatpush1.bf16.msra.mxu0 0
    %1113 = vmatprep.subr.bf16.mxu0 0
    %1114 = vmatpush1.bf16.msra.mxu0 0
    %1115 = vmatprep.subr.bf16.mxu0 0
    %1116 = vmatpush1.bf16.msra.mxu0 0
    %1117 = vmatprep.subr.bf16.mxu0 0
    %1118 = vmatpush1.bf16.msra.mxu0 0
    %1119 = vmatprep.subr.bf16.mxu0 0
    %1120 = vmatpush1.bf16.msra.mxu0 0
    %1121 = vmatprep.subr.bf16.mxu0 0
    %1122 = vmatpush1.bf16.msra.mxu0 0
    %1123 = vmatprep.subr.bf16.mxu0 0
    %1124 = vmatpush1.bf16.msra.mxu0 0
    %1125 = vmatprep.subr.bf16.mxu0 0
    %1126 = vmatpush1.bf16.msra.mxu0 0
    %1127 = vmatprep.subr.bf16.mxu0 0
    %1128 = vmatpush1.bf16.msra.mxu0 0
    %1129 = vmatprep.subr.bf16.mxu0 0
    %1130 = vmatpush1.bf16.msra.mxu0 0
    %1131 = vmatprep.subr.bf16.mxu0 0
    %1132 = vmatpush1.bf16.msra.mxu0 0
    %1133 = vmatprep.mubr.bf16.mxu0 0
    %1134 = vmatmul.mubr.bf16.gmra.mrb[0].mxu0 %v1099
    %v1135 = vpop.f32.mrb[0].mxu0
    %v1136 = vadd.f32 %v1095, %v1135
    %v1137 = vpop.f32.mrb[0].mxu0
    %v1138 = vpop.f32.mrb[0].mxu0
    %v1139 = vadd.f32 %v1095, %v1138
    %v1140 = vpop.f32.mrb[0].mxu0
    %1141 = vdwg.mxu0
    %v1142 = vadd.f32 %v986, %v1136
    %v1143 = vadd.f32 %v987, %v1139
    %v1144 = vsel %vm97, %v1142, 0.0
    %1145 = vadd.xlane.f32.xlu0 %v1144
    %v1146 = vpop.xlane.xlu0 %1145
    %v1147 = vsel %vm97, %v1143, 0.0
    %1148 = vadd.xlane.f32.xlu0 %v1147
    %v1149 = vpop.xlane.xlu0 %1148
    %v1150 = vmul.f32 %v1146, %v958
    %v1151 = vmul.f32 %v1149, %v958
    %v1152 = vsub.f32 %v1142, %v1150
    %v1153 = vsub.f32 %v1143, %v1151
    %v1154 = vmul.f32 %v1152, %v1152
    %v1155 = vmul.f32 %v1153, %v1153
    %v1156 = vsel %vm97, %v1154, 0.0
    %1157 = vadd.xlane.f32.xlu0 %v1156
    %v1158 = vpop.xlane.xlu0 %1157
    %v1159 = vsel %vm97, %v1155, 0.0
    %1160 = vadd.xlane.f32.xlu0 %v1159
    %v1161 = vpop.xlane.xlu0 %1160
    %v1162 = vmul.f32 %v1158, %v958
    %v1163 = vmul.f32 %v1161, %v958
    %v1164 = vadd.f32 %v1162, 1e-05
    %v1165 = vadd.f32 %v1163, 1e-05
    %v1166 = vrsqrt.pop %v1164
    %v1167 = vrsqrt.pop %v1165
    %v1168 = vmul.f32 %v1152, %v1166
    %v1169 = vmul.f32 %v1153, %v1167
    %1170 = vrot.lane.b32.xlu0 %v973, 64
    %v1171 = vpop.permute.xlu0 %1170
    %v1173 = vmul.f32 %v1168, %v1171
    %v1174 = vmul.f32 %v1169, %v1171
    %1175 = vrot.lane.b32.xlu0 %v973, 32
    %v1176 = vpop.permute.xlu0 %1175
    %v1178 = vadd.f32 %v1173, %v1176
    %v1179 = vadd.f32 %v1174, %v1176
    %1180 = vst.msk [vmem:[#allocation8] sm:$0xff] %vm97, %v1178
    %1181 = vst.msk [vmem:[#allocation8 + $0x8] sm:$0xff] %vm97, %v1179
    // Predicated region
    $region26: #{transformer_encoder_layer.1} parent=1 // pred_check
      _
    $region27: #{transformer_encoder_layer.1} parent=1 // pred_check_branch
      %1183 = sbr.rel (0) target = $region29
    $region28: #{transformer_encoder_layer.1} parent=1 // pred_region
      %s1185 = ssub.s32 256, 256
      %1186 = vsyncadd [#allocation4], %s1185
      %s1187 = sshll.u32 [#allocation8], 4
      %s1188 = int_to_ptr.vmem [resolvable:$true] %s1187
      %1193 = dma.vmem_to_hbm [thread:$0]  %s1188, 256, %s3, [#allocation4], 128, 128, 8
    $region29: #{transformer_encoder_layer.1} parent=1 // pred_fallthru
      _
    // Predicated region
    $region30: #{transformer_encoder_layer.1} parent=1 // pred_check
      _
    $region31: #{transformer_encoder_layer.1} parent=1 // pred_check_branch
      %1195 = sbr.rel (0) target = $region33
    $region32: #{transformer_encoder_layer.1} parent=1 // pred_region
      %1196 = dma.done [#allocation4], 256
    $region33: #{transformer_encoder_layer.1} parent=1 // pred_fallthru
      _
    %1197 = vsyncpa [#allocation3], 1
    %1198 = vsyncpa [#allocation6], 1
    %1199 = vsyncpa [#allocation4], 1

</llo_original>
